<compile_context>
chip_gen: v6e
topology: v6e:2x2x1
jax: 0.10.0
libtpu: 0.0.40
codegen_flags: <defaults>
</compile_context>

<pallas_src>
import jax
import jax.numpy as jnp
from jax.experimental import pallas as pl
from jax.experimental.pallas import tpu as pltpu

D_IN, D_IN_PAD = 28 * 28, 896     # 896 = 7 * 128 (lane-dense)
D_H1 = 128
D_H2, D_H2_PAD = 64, 128
D_OUT, D_OUT_PAD = 10, 128


def mlp_kernel(x_ref, w1_ref, b1_ref, w2_ref, b2_ref, w3_ref, b3_ref, o_ref):
    # fc1 + relu (f32 accumulation on the MXU, bias add on the VPU in f32)
    h1 = jnp.dot(x_ref[...], w1_ref[...], preferred_element_type=jnp.float32)
    h1 = jnp.maximum(h1 + b1_ref[...], 0.0)
    # fc2 + relu
    h2 = jnp.dot(h1.astype(w2_ref.dtype), w2_ref[...],
                 preferred_element_type=jnp.float32)
    h2 = jnp.maximum(h2 + b2_ref[...], 0.0)
    # fc3 (no activation)
    out = jnp.dot(h2.astype(w3_ref.dtype), w3_ref[...],
                  preferred_element_type=jnp.float32)
    o_ref[...] = (out + b3_ref[...]).astype(o_ref.dtype)


def _pick_batch_tile(B):
    """Fill the MXU M dim while keeping >=2 grid steps when the batch allows
    (v7x has 2 TensorCores) and staying well inside scoped VMEM on all gens
    (v5e 16 MiB / v6e 32 MiB / v7x 32 MiB defaults)."""
    for tb in (512, 256, 128, 64, 32, 16, 8):
        if B >= 2 * tb:
            return tb
    return 8


def net_forward(x_nchw, params, *, batch_tile=None, compute_dtype=jnp.float32):
    """x_nchw: [B, 1, 28, 28] float32 -> logits [B, 10] float32."""
    w1, b1, w2, b2, w3, b3 = params
    B = x_nchw.shape[0]
    x = x_nchw.reshape(B, D_IN)  # x.view(-1, 784)

    tb = _pick_batch_tile(B) if batch_tile is None else batch_tile
    B_pad = pl.cdiv(B, tb) * tb

    cdt = compute_dtype
    # Zero padding everywhere is a mathematical no-op through Linear/ReLU.
    x_p = jnp.zeros((B_pad, D_IN_PAD), cdt).at[:B, :D_IN].set(x.astype(cdt))
    w1_p = jnp.zeros((D_IN_PAD, D_H1), cdt).at[:D_IN, :].set(w1.astype(cdt))
    b1_p = b1.astype(jnp.float32)                                   # (1, 128)
    w2_p = jnp.zeros((D_H1, D_H2_PAD), cdt).at[:, :D_H2].set(w2.astype(cdt))
    b2_p = jnp.zeros((1, D_H2_PAD), jnp.float32).at[:, :D_H2].set(b2)
    w3_p = jnp.zeros((D_H2_PAD, D_OUT_PAD), cdt).at[:D_H2, :D_OUT].set(
        w3.astype(cdt))
    b3_p = jnp.zeros((1, D_OUT_PAD), jnp.float32).at[:, :D_OUT].set(b3)

    grid = (B_pad // tb,)

    out = pl.pallas_call(
        mlp_kernel,
        out_shape=jax.ShapeDtypeStruct((B_pad, D_OUT_PAD), jnp.float32),
        grid_spec=pltpu.PrefetchScalarGridSpec(
            num_scalar_prefetch=0,
            grid=grid,
            in_specs=[
                pl.BlockSpec((tb, D_IN_PAD), lambda i: (i, 0)),        # x tile
                pl.BlockSpec((D_IN_PAD, D_H1), lambda i: (0, 0)),      # W1
                pl.BlockSpec((1, D_H1), lambda i: (0, 0)),             # b1
                pl.BlockSpec((D_H1, D_H2_PAD), lambda i: (0, 0)),      # W2
                pl.BlockSpec((1, D_H2_PAD), lambda i: (0, 0)),         # b2
                pl.BlockSpec((D_H2_PAD, D_OUT_PAD), lambda i: (0, 0)), # W3
                pl.BlockSpec((1, D_OUT_PAD), lambda i: (0, 0)),        # b3
            ],
            out_specs=pl.BlockSpec((tb, D_OUT_PAD), lambda i: (i, 0)),
        ),
        compiler_params=pltpu.CompilerParams(
            dimension_semantics=("parallel",),
        ),
    )(x_p, w1_p, b1_p, w2_p, b2_p, w3_p, b3_p)

    return out[:B, :D_OUT]


def init_params(key):
    """Deterministic init matching PyTorch Linear shapes (stored transposed:
    weights are [in, out] so the kernel computes x @ W + b)."""
    ks = jax.random.split(key, 6)

    def linear(kw, kb, fan_in, fan_out):
        bound = 1.0 / jnp.sqrt(fan_in)
        w = jax.random.uniform(kw, (fan_in, fan_out), jnp.float32, -bound, bound)
        b = jax.random.uniform(kb, (1, fan_out), jnp.float32, -bound, bound)
        return w, b

    w1, b1 = linear(ks[0], ks[1], D_IN, D_H1)
    w2, b2 = linear(ks[2], ks[3], D_H1, D_H2)
    w3, b3 = linear(ks[4], ks[5], D_H2, D_OUT)
    return (w1, b1, w2, b2, w3, b3)


def reference_forward(x_nchw, params):
    w1, b1, w2, b2, w3, b3 = params
    x = x_nchw.reshape(x_nchw.shape[0], -1)
    h1 = jnp.maximum(x @ w1 + b1, 0.0)
    h2 = jnp.maximum(h1 @ w2 + b2, 0.0)
    return h2 @ w3 + b3


if __name__ == "__main__":
    key = jax.random.PRNGKey(0)
    k_x, k_p = jax.random.split(key)

    # MNIST-style NCHW input; batch deliberately NOT a multiple of the tile
    # to exercise the wrapper-side batch padding path.
    B = 300
    x = jax.random.normal(k_x, (B, 1, 28, 28), dtype=jnp.float32)
    params = init_params(k_p)

    ref = reference_forward(x, params)

    # f32 path: exact-ish match against the reference.
    out_f32 = jax.block_until_ready(net_forward(x, params,
                                                compute_dtype=jnp.float32))
    assert out_f32.shape == (B, 10)
    assert jnp.allclose(out_f32, ref, atol=1e-4, rtol=1e-4), "f32 mismatch"

    # bf16-input / f32-accumulate path (v6e/v7x MXU native): looser tolerance.
    out_bf16 = jax.block_until_ready(net_forward(x, params,
                                                 compute_dtype=jnp.bfloat16))
    assert out_bf16.shape == (B, 10)
    assert jnp.allclose(out_bf16, ref, atol=1e-1, rtol=1e-1), "bf16 mismatch"

    print("KERNEL_OK")
</pallas_src>

<mosaic_0001>
module attributes {stable_mosaic.version = 11 : i64} {
  func.func @mlp_kernel(%arg0: i32, %arg1: memref<128x896xf32, #tpu.memory_space<vmem>>, %arg2: memref<896x128xf32, #tpu.memory_space<vmem>>, %arg3: memref<1x128xf32, #tpu.memory_space<vmem>>, %arg4: memref<128x128xf32, #tpu.memory_space<vmem>>, %arg5: memref<1x128xf32, #tpu.memory_space<vmem>>, %arg6: memref<128x128xf32, #tpu.memory_space<vmem>>, %arg7: memref<1x128xf32, #tpu.memory_space<vmem>>, %arg8: memref<128x128xf32, #tpu.memory_space<vmem>>) attributes {dimension_semantics = [#tpu.dimension_semantics<parallel>], iteration_bounds = array<i64: 3>, scalar_prefetch = 0 : i64, scratch_operands = 0 : i64, tpu.core_type = #tpu.core_type<tc>, window_params = [{transform_indices = @transform_0, window_bounds = array<i64: 128, 896>}, {pipeline_mode = #tpu.pipeline_mode<synchronous>, transform_indices = @transform_1, window_bounds = array<i64: 896, 128>}, {pipeline_mode = #tpu.pipeline_mode<synchronous>, transform_indices = @transform_2, window_bounds = array<i64: 1, 128>}, {pipeline_mode = #tpu.pipeline_mode<synchronous>, transform_indices = @transform_3, window_bounds = array<i64: 128, 128>}, {pipeline_mode = #tpu.pipeline_mode<synchronous>, transform_indices = @transform_4, window_bounds = array<i64: 1, 128>}, {pipeline_mode = #tpu.pipeline_mode<synchronous>, transform_indices = @transform_5, window_bounds = array<i64: 128, 128>}, {pipeline_mode = #tpu.pipeline_mode<synchronous>, transform_indices = @transform_6, window_bounds = array<i64: 1, 128>}, {transform_indices = @transform_7, window_bounds = array<i64: 128, 128>}]} {
    %c0 = arith.constant 0 : index
    %c0_0 = arith.constant 0 : index
    %0 = vector.load %arg1[%c0, %c0_0] : memref<128x896xf32, #tpu.memory_space<vmem>>, vector<128x896xf32>
    %c0_1 = arith.constant 0 : index
    %c0_2 = arith.constant 0 : index
    %1 = vector.load %arg2[%c0_1, %c0_2] : memref<896x128xf32, #tpu.memory_space<vmem>>, vector<896x128xf32>
    %cst = arith.constant dense<0.000000e+00> : vector<128x128xf32>
    %2 = tpu.matmul %0, %1, %cst {dimension_numbers = #tpu.dot_dimension_numbers<[1], [0], [0], [1], [0, 0, 1, 1], [], []>} : vector<128x896xf32>, vector<896x128xf32>, vector<128x128xf32> -> vector<128x128xf32>
    %c0_3 = arith.constant 0 : index
    %c0_4 = arith.constant 0 : index
    %3 = vector.load %arg3[%c0_3, %c0_4] : memref<1x128xf32, #tpu.memory_space<vmem>>, vector<1x128xf32>
    %4 = vector.broadcast %3 : vector<1x128xf32> to vector<128x128xf32>
    %5 = arith.addf %2, %4 : vector<128x128xf32>
    %cst_5 = arith.constant 0.000000e+00 : f32
    %6 = vector.broadcast %cst_5 : f32 to vector<128x128xf32>
    %7 = arith.maximumf %5, %6 : vector<128x128xf32>
    %c0_6 = arith.constant 0 : index
    %c0_7 = arith.constant 0 : index
    %8 = vector.load %arg4[%c0_6, %c0_7] : memref<128x128xf32, #tpu.memory_space<vmem>>, vector<128x128xf32>
    %cst_8 = arith.constant dense<0.000000e+00> : vector<128x128xf32>
    %9 = tpu.matmul %7, %8, %cst_8 {dimension_numbers = #tpu.dot_dimension_numbers<[1], [0], [0], [1], [0, 0, 1, 1], [], []>} : vector<128x128xf32>, vector<128x128xf32>, vector<128x128xf32> -> vector<128x128xf32>
    %c0_9 = arith.constant 0 : index
    %c0_10 = arith.constant 0 : index
    %10 = vector.load %arg5[%c0_9, %c0_10] : memref<1x128xf32, #tpu.memory_space<vmem>>, vector<1x128xf32>
    %11 = vector.broadcast %10 : vector<1x128xf32> to vector<128x128xf32>
    %12 = arith.addf %9, %11 : vector<128x128xf32>
    %cst_11 = arith.constant 0.000000e+00 : f32
    %13 = vector.broadcast %cst_11 : f32 to vector<128x128xf32>
    %14 = arith.maximumf %12, %13 : vector<128x128xf32>
    %c0_12 = arith.constant 0 : index
    %c0_13 = arith.constant 0 : index
    %15 = vector.load %arg6[%c0_12, %c0_13] : memref<128x128xf32, #tpu.memory_space<vmem>>, vector<128x128xf32>
    %cst_14 = arith.constant dense<0.000000e+00> : vector<128x128xf32>
    %16 = tpu.matmul %14, %15, %cst_14 {dimension_numbers = #tpu.dot_dimension_numbers<[1], [0], [0], [1], [0, 0, 1, 1], [], []>} : vector<128x128xf32>, vector<128x128xf32>, vector<128x128xf32> -> vector<128x128xf32>
    %c0_15 = arith.constant 0 : index
    %c0_16 = arith.constant 0 : index
    %17 = vector.load %arg7[%c0_15, %c0_16] : memref<1x128xf32, #tpu.memory_space<vmem>>, vector<1x128xf32>
    %18 = vector.broadcast %17 : vector<1x128xf32> to vector<128x128xf32>
    %19 = arith.addf %16, %18 : vector<128x128xf32>
    %c0_17 = arith.constant 0 : index
    %c0_18 = arith.constant 0 : index
    %20 = vector.load %arg8[%c0_17, %c0_18] : memref<128x128xf32, #tpu.memory_space<vmem>>, vector<128x128xf32>
    tpu.vector_store %arg8[%c0_17, %c0_18], %19 {strides = array<i32>} : memref<128x128xf32, #tpu.memory_space<vmem>>, vector<128x128xf32>,
    return
  }
  func.func @transform_0(%arg0: i32) -> (i32, i32) {
    %c0_i32 = arith.constant 0 : i32
    %c0_i32_0 = arith.constant 0 : i32
    return %arg0, %c0_i32 : i32, i32
  }
  func.func @transform_1(%arg0: i32) -> (i32, i32) {
    %c0_i32 = arith.constant 0 : i32
    %c0_i32_0 = arith.constant 0 : i32
    %c0_i32_1 = arith.constant 0 : i32
    return %c0_i32, %c0_i32_0 : i32, i32
  }
  func.func @transform_2(%arg0: i32) -> (i32, i32) {
    %c0_i32 = arith.constant 0 : i32
    %c0_i32_0 = arith.constant 0 : i32
    %c0_i32_1 = arith.constant 0 : i32
    return %c0_i32, %c0_i32_0 : i32, i32
  }
  func.func @transform_3(%arg0: i32) -> (i32, i32) {
    %c0_i32 = arith.constant 0 : i32
    %c0_i32_0 = arith.constant 0 : i32
    %c0_i32_1 = arith.constant 0 : i32
    return %c0_i32, %c0_i32_0 : i32, i32
  }
  func.func @transform_4(%arg0: i32) -> (i32, i32) {
    %c0_i32 = arith.constant 0 : i32
    %c0_i32_0 = arith.constant 0 : i32
    %c0_i32_1 = arith.constant 0 : i32
    return %c0_i32, %c0_i32_0 : i32, i32
  }
  func.func @transform_5(%arg0: i32) -> (i32, i32) {
    %c0_i32 = arith.constant 0 : i32
    %c0_i32_0 = arith.constant 0 : i32
    %c0_i32_1 = arith.constant 0 : i32
    return %c0_i32, %c0_i32_0 : i32, i32
  }
  func.func @transform_6(%arg0: i32) -> (i32, i32) {
    %c0_i32 = arith.constant 0 : i32
    %c0_i32_0 = arith.constant 0 : i32
    %c0_i32_1 = arith.constant 0 : i32
    return %c0_i32, %c0_i32_0 : i32, i32
  }
  func.func @transform_7(%arg0: i32) -> (i32, i32) {
    %c0_i32 = arith.constant 0 : i32
    %c0_i32_0 = arith.constant 0 : i32
    return %arg0, %c0_i32 : i32, i32
  }
}

</mosaic_0001>

<llo_original>
// kernel: tpu_custom_call.1
$region0: #{tpu_custom_call.1}
  #allocation0 [shape = 'u32[]', space=smem, size = 0x4, offset = 0x4, fixed_abs, tag = 'smem constant byte address 0x4 - core index']
  #allocation1 [shape = 'u32[144,128]{1,0:T(1,128)}', space=vmem, size = 0x12000, scoped, tag = 'internal scratch']
  %s0 = inlined_call_operand.hbm [shape: f32[384,896], index: 0, kind: input, shape index: {}]
  %s1 = inlined_call_operand.hbm [shape: f32[896,128], index: 1, kind: input, shape index: {}]
  %s2 = inlined_call_operand.hbm [shape: f32[1,128], index: 2, kind: input, shape index: {}]
  %s3 = inlined_call_operand.hbm [shape: f32[128,128], index: 3, kind: input, shape index: {}]
  %s4 = inlined_call_operand.hbm [shape: f32[1,128], index: 4, kind: input, shape index: {}]
  %s5 = inlined_call_operand.hbm [shape: f32[128,128], index: 5, kind: input, shape index: {}]
  %s6 = inlined_call_operand.hbm [shape: f32[1,128], index: 6, kind: input, shape index: {}]
  %s7 = inlined_call_operand.hbm [shape: f32[384,128], index: 7, kind: output, shape index: {}]
  %s8 = sld [smem:[#allocation0]]
  $region89: #{tpu_custom_call.1} parent=0
    _
  %s10 = ssub.s32 1, %s8
  %s11 = scalar_select 0, %s10, %s8
  $region1: #{tpu_custom_call.1} parent=0
    #allocation2 [shape = 'u8[917504]{0}', space=vmem, size = 0xe0000, scoped, tag = 'input window, operand 0']
    #allocation3 [shape = 's32[2]{0}', space=sflag, size = 0x8, scoped, tag = 'scoped memory for tpu_custom_call.1']
    #allocation4 [shape = 's32[2]{0}', space=sflag, size = 0x8, scoped, tag = 'scoped memory for tpu_custom_call.1']
    #allocation5 [shape = 'u8[458752]{0}', space=vmem, size = 0x70000, scoped, tag = 'input window, operand 1, single buffered']
    #allocation6 [shape = 's32[1]{0}', space=sflag, size = 0x4, scoped, tag = 'scoped memory for tpu_custom_call.1']
    #allocation7 [shape = 'u8[512]{0}', space=vmem, size = 0x400, scoped, tag = 'input window, operand 2, single buffered']
    #allocation8 [shape = 'u8[65536]{0}', space=vmem, size = 0x10000, scoped, tag = 'input window, operand 3, single buffered']
    #allocation9 [shape = 's32[1]{0}', space=sflag, size = 0x4, scoped, tag = 'scoped memory for tpu_custom_call.1']
    #allocation10 [shape = 'u8[512]{0}', space=vmem, size = 0x400, scoped, tag = 'input window, operand 4, single buffered']
    #allocation11 [shape = 'u8[65536]{0}', space=vmem, size = 0x10000, scoped, tag = 'input window, operand 5, single buffered']
    #allocation12 [shape = 's32[1]{0}', space=sflag, size = 0x4, scoped, tag = 'scoped memory for tpu_custom_call.1']
    #allocation13 [shape = 'u8[512]{0}', space=vmem, size = 0x400, scoped, tag = 'input window, operand 6, single buffered']
    #allocation14 [shape = 'u8[131072]{0}', space=vmem, size = 0x20000, scoped, tag = 'output window, operand 0']
    %12 = vsyncpa [#allocation3], 0
    %s13 = scalar_lea.sflag [#allocation3], 1
    %14 = vsyncpa %s13, 0
    %15 = vsyncpa [#allocation6], 0
    %16 = vsyncpa [#allocation9], 0
    %17 = vsyncpa [#allocation12], 0
    %18 = vsyncpa [#allocation4], 0
    %s19 = scalar_lea.sflag [#allocation4], 1
    %20 = vsyncpa %s19, 0
    loop: start=0, step=1, limit=5
    $region2: #{tpu_custom_call.1} parent=1 // loop_pre_header
      _
    $region3: #{tpu_custom_call.1} parent=1 // loop_header
      %s22 = sphi 0, %s26
      %p23 = scmp.ge.s32.totalorder %s22, 5
      %s32 = sphi 0, %s34
      %s35 = sphi 0, %s32
      %s36 = sphi 0, %s35
      %s52 = sphi 0, %s36
      %s56 = sphi 0, %s56
      %s58 = sphi 0, %s56
      %s59 = sphi 0, %s58
      %s73 = sphi 0, %s59
      %s77 = sphi 0, %s77
      %s79 = sphi 0, %s77
      %s80 = sphi 0, %s79
      %s94 = sphi 0, %s80
      %s98 = sphi 0, %s98
      %s100 = sphi 0, %s98
      %s101 = sphi 0, %s100
      %s115 = sphi 0, %s101
      %s119 = sphi 0, %s119
      %s121 = sphi 0, %s119
      %s122 = sphi 0, %s121
      %s136 = sphi 0, %s122
      %s140 = sphi 0, %s140
      %s142 = sphi 0, %s140
      %s143 = sphi 0, %s142
      %s157 = sphi 0, %s143
      %s161 = sphi 0, %s161
      %s163 = sphi 0, %s161
      %s164 = sphi 0, %s163
      %s178 = sphi 0, %s164
      %s184 = sphi 0, %s186
      %s187 = sphi 0, %s184
      %s188 = sphi 0, %s187
      %s204 = sphi 0, %s188
    $region4: #{tpu_custom_call.1} parent=1 // loop_header_branch
      %25 = sbr.rel (%p23) target = $region8
    $region5: #{tpu_custom_call.1} parent=1 // loop_body
      %s27 = ssub.s32 %s22, 1
      %s28 = ssub.s32 %s22, 2
      %s29 = sadd.s32 %s22, 1
      %s30 = ssub.s32 %s22, %s29
      %p31 = scmp.eq.s32.totalorder %s30, 0
      %s33 = sadd.s32 %s32, 1
      %s34 = scalar_select %p31, %s32, %s33
      %p37 = pneg %p31
      %p38 = scmp.eq.s32.totalorder %s22, 2
      %p39 = por %p37, %p38
      %p40 = scmp.ne.s32.totalorder %s32, %s35
      %p41 = scmp.eq.s32.totalorder %s22, 0
      %p42 = por %p40, %p41
      %p43 = scmp.ne.s32.totalorder %s32, %s35
      %p44 = scmp.eq.s32.totalorder %s27, 2
      %p45 = por %p43, %p44
      %p46 = scmp.ne.s32.totalorder %s35, %s36
      %p47 = scmp.eq.s32.totalorder %s27, 0
      %p48 = por %p46, %p47
      %p49 = scmp.ne.s32.totalorder %s35, %s36
      %p50 = scmp.eq.s32.totalorder %s28, 2
      %p51 = por %p49, %p50
      %p53 = scmp.ne.s32.totalorder %s36, %s52
      %p54 = scmp.eq.s32.totalorder %s28, 0
      %p55 = por %p53, %p54
      %s57 = sadd.s32 %s56, 1
      %p60 = scmp.eq.s32.totalorder %s22, 2
      %p61 = scmp.ne.s32.totalorder %s56, %s58
      %p62 = scmp.eq.s32.totalorder %s22, 0
      %p63 = por %p61, %p62
      %p64 = scmp.ne.s32.totalorder %s56, %s58
      %p65 = scmp.eq.s32.totalorder %s27, 2
      %p66 = por %p64, %p65
      %p67 = scmp.ne.s32.totalorder %s58, %s59
      %p68 = scmp.eq.s32.totalorder %s27, 0
      %p69 = por %p67, %p68
      %p70 = scmp.ne.s32.totalorder %s58, %s59
      %p71 = scmp.eq.s32.totalorder %s28, 2
      %p72 = por %p70, %p71
      %p74 = scmp.ne.s32.totalorder %s59, %s73
      %p75 = scmp.eq.s32.totalorder %s28, 0
      %p76 = por %p74, %p75
      %s78 = sadd.s32 %s77, 1
      %p81 = scmp.eq.s32.totalorder %s22, 2
      %p82 = scmp.ne.s32.totalorder %s77, %s79
      %p83 = scmp.eq.s32.totalorder %s22, 0
      %p84 = por %p82, %p83
      %p85 = scmp.ne.s32.totalorder %s77, %s79
      %p86 = scmp.eq.s32.totalorder %s27, 2
      %p87 = por %p85, %p86
      %p88 = scmp.ne.s32.totalorder %s79, %s80
      %p89 = scmp.eq.s32.totalorder %s27, 0
      %p90 = por %p88, %p89
      %p91 = scmp.ne.s32.totalorder %s79, %s80
      %p92 = scmp.eq.s32.totalorder %s28, 2
      %p93 = por %p91, %p92
      %p95 = scmp.ne.s32.totalorder %s80, %s94
      %p96 = scmp.eq.s32.totalorder %s28, 0
      %p97 = por %p95, %p96
      %s99 = sadd.s32 %s98, 1
      %p102 = scmp.eq.s32.totalorder %s22, 2
      %p103 = scmp.ne.s32.totalorder %s98, %s100
      %p104 = scmp.eq.s32.totalorder %s22, 0
      %p105 = por %p103, %p104
      %p106 = scmp.ne.s32.totalorder %s98, %s100
      %p107 = scmp.eq.s32.totalorder %s27, 2
      %p108 = por %p106, %p107
      %p109 = scmp.ne.s32.totalorder %s100, %s101
      %p110 = scmp.eq.s32.totalorder %s27, 0
      %p111 = por %p109, %p110
      %p112 = scmp.ne.s32.totalorder %s100, %s101
      %p113 = scmp.eq.s32.totalorder %s28, 2
      %p114 = por %p112, %p113
      %p116 = scmp.ne.s32.totalorder %s101, %s115
      %p117 = scmp.eq.s32.totalorder %s28, 0
      %p118 = por %p116, %p117
      %s120 = sadd.s32 %s119, 1
      %p123 = scmp.eq.s32.totalorder %s22, 2
      %p124 = scmp.ne.s32.totalorder %s119, %s121
      %p125 = scmp.eq.s32.totalorder %s22, 0
      %p126 = por %p124, %p125
      %p127 = scmp.ne.s32.totalorder %s119, %s121
      %p128 = scmp.eq.s32.totalorder %s27, 2
      %p129 = por %p127, %p128
      %p130 = scmp.ne.s32.totalorder %s121, %s122
      %p131 = scmp.eq.s32.totalorder %s27, 0
      %p132 = por %p130, %p131
      %p133 = scmp.ne.s32.totalorder %s121, %s122
      %p134 = scmp.eq.s32.totalorder %s28, 2
      %p135 = por %p133, %p134
      %p137 = scmp.ne.s32.totalorder %s122, %s136
      %p138 = scmp.eq.s32.totalorder %s28, 0
      %p139 = por %p137, %p138
      %s141 = sadd.s32 %s140, 1
      %p144 = scmp.eq.s32.totalorder %s22, 2
      %p145 = scmp.ne.s32.totalorder %s140, %s142
      %p146 = scmp.eq.s32.totalorder %s22, 0
      %p147 = por %p145, %p146
      %p148 = scmp.ne.s32.totalorder %s140, %s142
      %p149 = scmp.eq.s32.totalorder %s27, 2
      %p150 = por %p148, %p149
      %p151 = scmp.ne.s32.totalorder %s142, %s143
      %p152 = scmp.eq.s32.totalorder %s27, 0
      %p153 = por %p151, %p152
      %p154 = scmp.ne.s32.totalorder %s142, %s143
      %p155 = scmp.eq.s32.totalorder %s28, 2
      %p156 = por %p154, %p155
      %p158 = scmp.ne.s32.totalorder %s143, %s157
      %p159 = scmp.eq.s32.totalorder %s28, 0
      %p160 = por %p158, %p159
      %s162 = sadd.s32 %s161, 1
      %p165 = scmp.eq.s32.totalorder %s22, 2
      %p166 = scmp.ne.s32.totalorder %s161, %s163
      %p167 = scmp.eq.s32.totalorder %s22, 0
      %p168 = por %p166, %p167
      %p169 = scmp.ne.s32.totalorder %s161, %s163
      %p170 = scmp.eq.s32.totalorder %s27, 2
      %p171 = por %p169, %p170
      %p172 = scmp.ne.s32.totalorder %s163, %s164
      %p173 = scmp.eq.s32.totalorder %s27, 0
      %p174 = por %p172, %p173
      %p175 = scmp.ne.s32.totalorder %s163, %s164
      %p176 = scmp.eq.s32.totalorder %s28, 2
      %p177 = por %p175, %p176
      %p179 = scmp.ne.s32.totalorder %s164, %s178
      %p180 = scmp.eq.s32.totalorder %s28, 0
      %p181 = por %p179, %p180
      %s182 = ssub.s32 %s22, %s29
      %p183 = scmp.eq.s32.totalorder %s182, 0
      %s185 = sadd.s32 %s184, 1
      %s186 = scalar_select %p183, %s184, %s185
      %p189 = pneg %p183
      %p190 = scmp.eq.s32.totalorder %s22, 2
      %p191 = por %p189, %p190
      %p192 = scmp.ne.s32.totalorder %s184, %s187
      %p193 = scmp.eq.s32.totalorder %s22, 0
      %p194 = por %p192, %p193
      %p195 = scmp.ne.s32.totalorder %s184, %s187
      %p196 = scmp.eq.s32.totalorder %s27, 2
      %p197 = por %p195, %p196
      %p198 = scmp.ne.s32.totalorder %s187, %s188
      %p199 = scmp.eq.s32.totalorder %s27, 0
      %p200 = por %p198, %p199
      %p201 = scmp.ne.s32.totalorder %s187, %s188
      %p202 = scmp.eq.s32.totalorder %s28, 2
      %p203 = por %p201, %p202
      %p205 = scmp.ne.s32.totalorder %s188, %s204
      %p206 = scmp.eq.s32.totalorder %s28, 0
      %p207 = por %p205, %p206
      %p208 = scmp.le.s32.totalorder 1, %s22
      %p209 = scmp.lt.s32.totalorder %s22, 4
      %p210 = pnand %p208, %p209
      %p211 = pneg %p210
      // Predicated region
      $region9: #{tpu_custom_call.1} parent=5 // pred_check
        _
      $region10: #{tpu_custom_call.1} parent=5 // pred_check_branch
        %213 = sbr.rel (%p210) target = $region12
      $region11: #{tpu_custom_call.1} parent=5 // pred_region
        %s214 = ssub.s32 %s22, 1
        // Predicated region
        $region13: #{tpu_custom_call.1} parent=11 // pred_check
          %p215 = pneg %p69
        $region14: #{tpu_custom_call.1} parent=11 // pred_check_branch
          %217 = sbr.rel (%p215) target = $region16
        $region15: #{tpu_custom_call.1} parent=11 // pred_region
          %s219 = ssub.s32 14336, 14336
          %220 = vsyncadd [#allocation6], %s219
          %s221 = sshll.u32 [#allocation5], 4
          %s222 = int_to_ptr.vmem [resolvable:$true] %s221
          %227 = dma.hbm_to_vmem [thread:$0]  %s1, 14336, %s222, [#allocation6], 128, 128, 8
        $region16: #{tpu_custom_call.1} parent=11 // pred_fallthru
          _
        // Predicated region
        $region17: #{tpu_custom_call.1} parent=11 // pred_check
          %p228 = pneg %p90
        $region18: #{tpu_custom_call.1} parent=11 // pred_check_branch
          %230 = sbr.rel (%p228) target = $region20
        $region19: #{tpu_custom_call.1} parent=11 // pred_region
          %s232 = ssub.s32 16, 16
          %233 = vsyncadd [#allocation6], %s232
          %s235 = sshll.u32 [#allocation7], 4
          %s236 = int_to_ptr.vmem [resolvable:$true] %s235
          %238 = dma.hbm_to_vmem [thread:$0]  %s2, 16, %s236, [#allocation6]
        $region20: #{tpu_custom_call.1} parent=11 // pred_fallthru
          _
        // Predicated region
        $region21: #{tpu_custom_call.1} parent=11 // pred_check
          %p239 = pneg %p111
        $region22: #{tpu_custom_call.1} parent=11 // pred_check_branch
          %241 = sbr.rel (%p239) target = $region24
        $region23: #{tpu_custom_call.1} parent=11 // pred_region
          %s243 = ssub.s32 2048, 2048
          %244 = vsyncadd [#allocation9], %s243
          %s245 = sshll.u32 [#allocation8], 4
          %s246 = int_to_ptr.vmem [resolvable:$true] %s245
          %251 = dma.hbm_to_vmem [thread:$0]  %s3, 2048, %s246, [#allocation9], 128, 128, 8
        $region24: #{tpu_custom_call.1} parent=11 // pred_fallthru
          _
        // Predicated region
        $region25: #{tpu_custom_call.1} parent=11 // pred_check
          %p252 = pneg %p132
        $region26: #{tpu_custom_call.1} parent=11 // pred_check_branch
          %254 = sbr.rel (%p252) target = $region28
        $region27: #{tpu_custom_call.1} parent=11 // pred_region
          %s256 = ssub.s32 16, 16
          %257 = vsyncadd [#allocation9], %s256
          %s259 = sshll.u32 [#allocation10], 4
          %s260 = int_to_ptr.vmem [resolvable:$true] %s259
          %262 = dma.hbm_to_vmem [thread:$0]  %s4, 16, %s260, [#allocation9]
        $region28: #{tpu_custom_call.1} parent=11 // pred_fallthru
          _
        // Predicated region
        $region29: #{tpu_custom_call.1} parent=11 // pred_check
          %p263 = pneg %p153
        $region30: #{tpu_custom_call.1} parent=11 // pred_check_branch
          %265 = sbr.rel (%p263) target = $region32
        $region31: #{tpu_custom_call.1} parent=11 // pred_region
          %s267 = ssub.s32 2048, 2048
          %268 = vsyncadd [#allocation12], %s267
          %s269 = sshll.u32 [#allocation11], 4
          %s270 = int_to_ptr.vmem [resolvable:$true] %s269
          %275 = dma.hbm_to_vmem [thread:$0]  %s5, 2048, %s270, [#allocation12], 128, 128, 8
        $region32: #{tpu_custom_call.1} parent=11 // pred_fallthru
          _
        // Predicated region
        $region33: #{tpu_custom_call.1} parent=11 // pred_check
          %p276 = pneg %p174
        $region34: #{tpu_custom_call.1} parent=11 // pred_check_branch
          %278 = sbr.rel (%p276) target = $region36
        $region35: #{tpu_custom_call.1} parent=11 // pred_region
          %s280 = ssub.s32 16, 16
          %281 = vsyncadd [#allocation12], %s280
          %s283 = sshll.u32 [#allocation13], 4
          %s284 = int_to_ptr.vmem [resolvable:$true] %s283
          %286 = dma.hbm_to_vmem [thread:$0]  %s6, 16, %s284, [#allocation12]
        $region36: #{tpu_custom_call.1} parent=11 // pred_fallthru
          _
      $region12: #{tpu_custom_call.1} parent=5 // pred_fallthru
        _
      %p287 = scmp.lt.s32.totalorder %s22, 3
      // Predicated region
      $region37: #{tpu_custom_call.1} parent=5 // pred_check
        %p288 = pneg %p287
      $region38: #{tpu_custom_call.1} parent=5 // pred_check_branch
        %290 = sbr.rel (%p288) target = $region40
      $region39: #{tpu_custom_call.1} parent=5 // pred_region
        // Predicated region
        $region41: #{tpu_custom_call.1} parent=39 // pred_check
          %p291 = pneg %p42
        $region42: #{tpu_custom_call.1} parent=39 // pred_check_branch
          %293 = sbr.rel (%p291) target = $region44
        $region43: #{tpu_custom_call.1} parent=39 // pred_region
          %s294 = sand.u32 %s32, 1
          %s295 = scalar_lea.sflag [#allocation3], %s294
          %s296 = sand.u32 %s32, 1
          %s297 = smul.addr %s296, 896
          %s298 = scalar_lea.vmem [#allocation2], %s297
          %s299 = smul.u32 16, %s22
          %s301 = ssub.s32 14336, 14336
          %302 = vsyncadd %s295, %s301
          %s303 = smul.addr %s299, 7
          %s304 = smul.addr %s303, 128
          %s305 = scalar_lea.hbm %s0, %s304
          %s306 = sshll.u32 %s298, 4
          %s307 = int_to_ptr.vmem [resolvable:$true] %s306
          %312 = dma.hbm_to_vmem [thread:$0]  %s305, 14336, %s307, %s295, 896, 896, 56
        $region44: #{tpu_custom_call.1} parent=39 // pred_fallthru
          _
      $region40: #{tpu_custom_call.1} parent=5 // pred_fallthru
        _
      %p313 = scmp.le.s32.totalorder 1, %s22
      %p314 = scmp.lt.s32.totalorder %s22, 4
      %p315 = pnand %p313, %p314
      %p316 = pneg %p315
      // Predicated region
      $region45: #{tpu_custom_call.1} parent=5 // pred_check
        _
      $region46: #{tpu_custom_call.1} parent=5 // pred_check_branch
        %318 = sbr.rel (%p315) target = $region48
      $region47: #{tpu_custom_call.1} parent=5 // pred_region
        %s319 = ssub.s32 %s22, 1
        %s320 = sand.u32 %s35, 1
        %s321 = scalar_lea.sflag [#allocation3], %s320
        %s322 = sand.u32 %s35, 1
        %s323 = smul.addr %s322, 896
        %s324 = scalar_lea.vmem [#allocation2], %s323
        // Predicated region
        $region49: #{tpu_custom_call.1} parent=47 // pred_check
          %p325 = pneg %p48
        $region50: #{tpu_custom_call.1} parent=47 // pred_check_branch
          %327 = sbr.rel (%p325) target = $region52
        $region51: #{tpu_custom_call.1} parent=47 // pred_region
          %328 = dma.done %s321, 14336
        $region52: #{tpu_custom_call.1} parent=47 // pred_fallthru
          _
        // Predicated region
        $region53: #{tpu_custom_call.1} parent=47 // pred_check
          %p329 = pneg %p69
        $region54: #{tpu_custom_call.1} parent=47 // pred_check_branch
          %331 = sbr.rel (%p329) target = $region56
        $region55: #{tpu_custom_call.1} parent=47 // pred_region
          %332 = dma.done [#allocation6], 14336
        $region56: #{tpu_custom_call.1} parent=47 // pred_fallthru
          _
        // Predicated region
        $region57: #{tpu_custom_call.1} parent=47 // pred_check
          %p333 = pneg %p90
        $region58: #{tpu_custom_call.1} parent=47 // pred_check_branch
          %335 = sbr.rel (%p333) target = $region60
        $region59: #{tpu_custom_call.1} parent=47 // pred_region
          %336 = dma.done [#allocation6], 16
        $region60: #{tpu_custom_call.1} parent=47 // pred_fallthru
          _
        // Predicated region
        $region61: #{tpu_custom_call.1} parent=47 // pred_check
          %p337 = pneg %p111
        $region62: #{tpu_custom_call.1} parent=47 // pred_check_branch
          %339 = sbr.rel (%p337) target = $region64
        $region63: #{tpu_custom_call.1} parent=47 // pred_region
          %340 = dma.done [#allocation9], 2048
        $region64: #{tpu_custom_call.1} parent=47 // pred_fallthru
          _
        // Predicated region
        $region65: #{tpu_custom_call.1} parent=47 // pred_check
          %p341 = pneg %p132
        $region66: #{tpu_custom_call.1} parent=47 // pred_check_branch
          %343 = sbr.rel (%p341) target = $region68
        $region67: #{tpu_custom_call.1} parent=47 // pred_region
          %344 = dma.done [#allocation9], 16
        $region68: #{tpu_custom_call.1} parent=47 // pred_fallthru
          _
        // Predicated region
        $region69: #{tpu_custom_call.1} parent=47 // pred_check
          %p345 = pneg %p153
        $region70: #{tpu_custom_call.1} parent=47 // pred_check_branch
          %347 = sbr.rel (%p345) target = $region72
        $region71: #{tpu_custom_call.1} parent=47 // pred_region
          %348 = dma.done [#allocation12], 2048
        $region72: #{tpu_custom_call.1} parent=47 // pred_fallthru
          _
        // Predicated region
        $region73: #{tpu_custom_call.1} parent=47 // pred_check
          %p349 = pneg %p174
        $region74: #{tpu_custom_call.1} parent=47 // pred_check_branch
          %351 = sbr.rel (%p349) target = $region76
        $region75: #{tpu_custom_call.1} parent=47 // pred_region
          %352 = dma.done [#allocation12], 16
        $region76: #{tpu_custom_call.1} parent=47 // pred_fallthru
          _
        %s353 = sand.u32 %s35, 1
        %s354 = scalar_lea.sflag [#allocation3], %s353
        %s355 = sand.u32 %s35, 1
        %s356 = smul.addr %s355, 896
        %s357 = scalar_lea.vmem [#allocation2], %s356
        %p358 = pneg %p48
        %p359 = pneg %p45
        %p360 = pneg %p69
        %p361 = pneg %p66
        %p362 = pneg %p90
        %p363 = pneg %p87
        %p364 = pneg %p111
        %p365 = pneg %p108
        %p366 = pneg %p132
        %p367 = pneg %p129
        %p368 = pneg %p153
        %p369 = pneg %p150
        %p370 = pneg %p174
        %p371 = pneg %p171
        %p372 = pneg %p200
        %p373 = pneg %p197
        %s374 = sand.u32 %s187, 1
        %s375 = scalar_lea.sflag [#allocation4], %s374
        %s376 = sand.u32 %s187, 1
        %s377 = smul.addr %s376, 128
        %s378 = scalar_lea.vmem [#allocation14], %s377
        %s379 = smul.u32 16, %s27
        %s380 = smul.u32 16, %s27
        %v381 = vld [vmem:[%s324] sm:$0xff]
        %v382 = vld [vmem:[%s324 + $0x8] sm:$0xff]
        %v383 = vld [vmem:[%s324 + $0x10] sm:$0xff]
        %v384 = vld [vmem:[%s324 + $0x18] sm:$0xff]
        %v385 = vld [vmem:[%s324 + $0x20] sm:$0xff]
        %v386 = vld [vmem:[%s324 + $0x28] sm:$0xff]
        %v387 = vld [vmem:[%s324 + $0x30] sm:$0xff]
        %v388 = vld [vmem:[%s324 + $0x38] sm:$0xff]
        %v389 = vld [vmem:[%s324 + $0x40] sm:$0xff]
        %v390 = vld [vmem:[%s324 + $0x48] sm:$0xff]
        %v391 = vld [vmem:[%s324 + $0x50] sm:$0xff]
        %v392 = vld [vmem:[%s324 + $0x58] sm:$0xff]
        %v393 = vld [vmem:[%s324 + $0x60] sm:$0xff]
        %v394 = vld [vmem:[%s324 + $0x68] sm:$0xff]
        %v395 = vld [vmem:[%s324 + $0x70] sm:$0xff]
        %v396 = vld [vmem:[%s324 + $0x78] sm:$0xff]
        %v397 = vld [vmem:[%s324 + $0x80] sm:$0xff]
        %v398 = vld [vmem:[%s324 + $0x88] sm:$0xff]
        %v399 = vld [vmem:[%s324 + $0x90] sm:$0xff]
        %v400 = vld [vmem:[%s324 + $0x98] sm:$0xff]
        %v401 = vld [vmem:[%s324 + $0xa0] sm:$0xff]
        %v402 = vld [vmem:[%s324 + $0xa8] sm:$0xff]
        %v403 = vld [vmem:[%s324 + $0xb0] sm:$0xff]
        %v404 = vld [vmem:[%s324 + $0xb8] sm:$0xff]
        %v405 = vld [vmem:[%s324 + $0xc0] sm:$0xff]
        %v406 = vld [vmem:[%s324 + $0xc8] sm:$0xff]
        %v407 = vld [vmem:[%s324 + $0xd0] sm:$0xff]
        %v408 = vld [vmem:[%s324 + $0xd8] sm:$0xff]
        %v409 = vld [vmem:[%s324 + $0xe0] sm:$0xff]
        %v410 = vld [vmem:[%s324 + $0xe8] sm:$0xff]
        %v411 = vld [vmem:[%s324 + $0xf0] sm:$0xff]
        %v412 = vld [vmem:[%s324 + $0xf8] sm:$0xff]
        %v413 = vld [vmem:[%s324 + $0x100] sm:$0xff]
        %v414 = vld [vmem:[%s324 + $0x108] sm:$0xff]
        %v415 = vld [vmem:[%s324 + $0x110] sm:$0xff]
        %v416 = vld [vmem:[%s324 + $0x118] sm:$0xff]
        %v417 = vld [vmem:[%s324 + $0x120] sm:$0xff]
        %v418 = vld [vmem:[%s324 + $0x128] sm:$0xff]
        %v419 = vld [vmem:[%s324 + $0x130] sm:$0xff]
        %v420 = vld [vmem:[%s324 + $0x138] sm:$0xff]
        %v421 = vld [vmem:[%s324 + $0x140] sm:$0xff]
        %v422 = vld [vmem:[%s324 + $0x148] sm:$0xff]
        %v423 = vld [vmem:[%s324 + $0x150] sm:$0xff]
        %v424 = vld [vmem:[%s324 + $0x158] sm:$0xff]
        %v425 = vld [vmem:[%s324 + $0x160] sm:$0xff]
        %v426 = vld [vmem:[%s324 + $0x168] sm:$0xff]
        %v427 = vld [vmem:[%s324 + $0x170] sm:$0xff]
        %v428 = vld [vmem:[%s324 + $0x178] sm:$0xff]
        %v429 = vld [vmem:[%s324 + $0x180] sm:$0xff]
        %v430 = vld [vmem:[%s324 + $0x188] sm:$0xff]
        %v431 = vld [vmem:[%s324 + $0x190] sm:$0xff]
        %v432 = vld [vmem:[%s324 + $0x198] sm:$0xff]
        %v433 = vld [vmem:[%s324 + $0x1a0] sm:$0xff]
        %v434 = vld [vmem:[%s324 + $0x1a8] sm:$0xff]
        %v435 = vld [vmem:[%s324 + $0x1b0] sm:$0xff]
        %v436 = vld [vmem:[%s324 + $0x1b8] sm:$0xff]
        %v437 = vld [vmem:[%s324 + $0x1c0] sm:$0xff]
        %v438 = vld [vmem:[%s324 + $0x1c8] sm:$0xff]
        %v439 = vld [vmem:[%s324 + $0x1d0] sm:$0xff]
        %v440 = vld [vmem:[%s324 + $0x1d8] sm:$0xff]
        %v441 = vld [vmem:[%s324 + $0x1e0] sm:$0xff]
        %v442 = vld [vmem:[%s324 + $0x1e8] sm:$0xff]
        %v443 = vld [vmem:[%s324 + $0x1f0] sm:$0xff]
        %v444 = vld [vmem:[%s324 + $0x1f8] sm:$0xff]
        %v445 = vld [vmem:[%s324 + $0x200] sm:$0xff]
        %v446 = vld [vmem:[%s324 + $0x208] sm:$0xff]
        %v447 = vld [vmem:[%s324 + $0x210] sm:$0xff]
        %v448 = vld [vmem:[%s324 + $0x218] sm:$0xff]
        %v449 = vld [vmem:[%s324 + $0x220] sm:$0xff]
        %v450 = vld [vmem:[%s324 + $0x228] sm:$0xff]
        %v451 = vld [vmem:[%s324 + $0x230] sm:$0xff]
        %v452 = vld [vmem:[%s324 + $0x238] sm:$0xff]
        %v453 = vld [vmem:[%s324 + $0x240] sm:$0xff]
        %v454 = vld [vmem:[%s324 + $0x248] sm:$0xff]
        %v455 = vld [vmem:[%s324 + $0x250] sm:$0xff]
        %v456 = vld [vmem:[%s324 + $0x258] sm:$0xff]
        %v457 = vld [vmem:[%s324 + $0x260] sm:$0xff]
        %v458 = vld [vmem:[%s324 + $0x268] sm:$0xff]
        %v459 = vld [vmem:[%s324 + $0x270] sm:$0xff]
        %v460 = vld [vmem:[%s324 + $0x278] sm:$0xff]
        %v461 = vld [vmem:[%s324 + $0x280] sm:$0xff]
        %v462 = vld [vmem:[%s324 + $0x288] sm:$0xff]
        %v463 = vld [vmem:[%s324 + $0x290] sm:$0xff]
        %v464 = vld [vmem:[%s324 + $0x298] sm:$0xff]
        %v465 = vld [vmem:[%s324 + $0x2a0] sm:$0xff]
        %v466 = vld [vmem:[%s324 + $0x2a8] sm:$0xff]
        %v467 = vld [vmem:[%s324 + $0x2b0] sm:$0xff]
        %v468 = vld [vmem:[%s324 + $0x2b8] sm:$0xff]
        %v469 = vld [vmem:[%s324 + $0x2c0] sm:$0xff]
        %v470 = vld [vmem:[%s324 + $0x2c8] sm:$0xff]
        %v471 = vld [vmem:[%s324 + $0x2d0] sm:$0xff]
        %v472 = vld [vmem:[%s324 + $0x2d8] sm:$0xff]
        %v473 = vld [vmem:[%s324 + $0x2e0] sm:$0xff]
        %v474 = vld [vmem:[%s324 + $0x2e8] sm:$0xff]
        %v475 = vld [vmem:[%s324 + $0x2f0] sm:$0xff]
        %v476 = vld [vmem:[%s324 + $0x2f8] sm:$0xff]
        %v477 = vld [vmem:[%s324 + $0x300] sm:$0xff]
        %v478 = vld [vmem:[%s324 + $0x308] sm:$0xff]
        %v479 = vld [vmem:[%s324 + $0x310] sm:$0xff]
        %v480 = vld [vmem:[%s324 + $0x318] sm:$0xff]
        %v481 = vld [vmem:[%s324 + $0x320] sm:$0xff]
        %v482 = vld [vmem:[%s324 + $0x328] sm:$0xff]
        %v483 = vld [vmem:[%s324 + $0x330] sm:$0xff]
        %v484 = vld [vmem:[%s324 + $0x338] sm:$0xff]
        %v485 = vld [vmem:[%s324 + $0x340] sm:$0xff]
        %v486 = vld [vmem:[%s324 + $0x348] sm:$0xff]
        %v487 = vld [vmem:[%s324 + $0x350] sm:$0xff]
        %v488 = vld [vmem:[%s324 + $0x358] sm:$0xff]
        %v489 = vld [vmem:[%s324 + $0x360] sm:$0xff]
        %v490 = vld [vmem:[%s324 + $0x368] sm:$0xff]
        %v491 = vld [vmem:[%s324 + $0x370] sm:$0xff]
        %v492 = vld [vmem:[%s324 + $0x378] sm:$0xff]
        %v493 = vld [vmem:[#allocation5] sm:$0xff]
        %v494 = vld [vmem:[#allocation5 + $0x8] sm:$0xff]
        %v495 = vld [vmem:[#allocation5 + $0x10] sm:$0xff]
        %v496 = vld [vmem:[#allocation5 + $0x18] sm:$0xff]
        %v497 = vld [vmem:[#allocation5 + $0x20] sm:$0xff]
        %v498 = vld [vmem:[#allocation5 + $0x28] sm:$0xff]
        %v499 = vld [vmem:[#allocation5 + $0x30] sm:$0xff]
        %v500 = vld [vmem:[#allocation5 + $0x38] sm:$0xff]
        %v501 = vld [vmem:[#allocation5 + $0x40] sm:$0xff]
        %v502 = vld [vmem:[#allocation5 + $0x48] sm:$0xff]
        %v503 = vld [vmem:[#allocation5 + $0x50] sm:$0xff]
        %v504 = vld [vmem:[#allocation5 + $0x58] sm:$0xff]
        %v505 = vld [vmem:[#allocation5 + $0x60] sm:$0xff]
        %v506 = vld [vmem:[#allocation5 + $0x68] sm:$0xff]
        %v507 = vld [vmem:[#allocation5 + $0x70] sm:$0xff]
        %v508 = vld [vmem:[#allocation5 + $0x78] sm:$0xff]
        %v509 = vld [vmem:[#allocation5 + $0x80] sm:$0xff]
        %v510 = vld [vmem:[#allocation5 + $0x88] sm:$0xff]
        %v511 = vld [vmem:[#allocation5 + $0x90] sm:$0xff]
        %v512 = vld [vmem:[#allocation5 + $0x98] sm:$0xff]
        %v513 = vld [vmem:[#allocation5 + $0xa0] sm:$0xff]
        %v514 = vld [vmem:[#allocation5 + $0xa8] sm:$0xff]
        %v515 = vld [vmem:[#allocation5 + $0xb0] sm:$0xff]
        %v516 = vld [vmem:[#allocation5 + $0xb8] sm:$0xff]
        %v517 = vld [vmem:[#allocation5 + $0xc0] sm:$0xff]
        %v518 = vld [vmem:[#allocation5 + $0xc8] sm:$0xff]
        %v519 = vld [vmem:[#allocation5 + $0xd0] sm:$0xff]
        %v520 = vld [vmem:[#allocation5 + $0xd8] sm:$0xff]
        %v521 = vld [vmem:[#allocation5 + $0xe0] sm:$0xff]
        %v522 = vld [vmem:[#allocation5 + $0xe8] sm:$0xff]
        %v523 = vld [vmem:[#allocation5 + $0xf0] sm:$0xff]
        %v524 = vld [vmem:[#allocation5 + $0xf8] sm:$0xff]
        %v525 = vld [vmem:[#allocation5 + $0x100] sm:$0xff]
        %v526 = vld [vmem:[#allocation5 + $0x108] sm:$0xff]
        %v527 = vld [vmem:[#allocation5 + $0x110] sm:$0xff]
        %v528 = vld [vmem:[#allocation5 + $0x118] sm:$0xff]
        %v529 = vld [vmem:[#allocation5 + $0x120] sm:$0xff]
        %v530 = vld [vmem:[#allocation5 + $0x128] sm:$0xff]
        %v531 = vld [vmem:[#allocation5 + $0x130] sm:$0xff]
        %v532 = vld [vmem:[#allocation5 + $0x138] sm:$0xff]
        %v533 = vld [vmem:[#allocation5 + $0x140] sm:$0xff]
        %v534 = vld [vmem:[#allocation5 + $0x148] sm:$0xff]
        %v535 = vld [vmem:[#allocation5 + $0x150] sm:$0xff]
        %v536 = vld [vmem:[#allocation5 + $0x158] sm:$0xff]
        %v537 = vld [vmem:[#allocation5 + $0x160] sm:$0xff]
        %v538 = vld [vmem:[#allocation5 + $0x168] sm:$0xff]
        %v539 = vld [vmem:[#allocation5 + $0x170] sm:$0xff]
        %v540 = vld [vmem:[#allocation5 + $0x178] sm:$0xff]
        %v541 = vld [vmem:[#allocation5 + $0x180] sm:$0xff]
        %v542 = vld [vmem:[#allocation5 + $0x188] sm:$0xff]
        %v543 = vld [vmem:[#allocation5 + $0x190] sm:$0xff]
        %v544 = vld [vmem:[#allocation5 + $0x198] sm:$0xff]
        %v545 = vld [vmem:[#allocation5 + $0x1a0] sm:$0xff]
        %v546 = vld [vmem:[#allocation5 + $0x1a8] sm:$0xff]
        %v547 = vld [vmem:[#allocation5 + $0x1b0] sm:$0xff]
        %v548 = vld [vmem:[#allocation5 + $0x1b8] sm:$0xff]
        %v549 = vld [vmem:[#allocation5 + $0x1c0] sm:$0xff]
        %v550 = vld [vmem:[#allocation5 + $0x1c8] sm:$0xff]
        %v551 = vld [vmem:[#allocation5 + $0x1d0] sm:$0xff]
        %v552 = vld [vmem:[#allocation5 + $0x1d8] sm:$0xff]
        %v553 = vld [vmem:[#allocation5 + $0x1e0] sm:$0xff]
        %v554 = vld [vmem:[#allocation5 + $0x1e8] sm:$0xff]
        %v555 = vld [vmem:[#allocation5 + $0x1f0] sm:$0xff]
        %v556 = vld [vmem:[#allocation5 + $0x1f8] sm:$0xff]
        %v557 = vld [vmem:[#allocation5 + $0x200] sm:$0xff]
        %v558 = vld [vmem:[#allocation5 + $0x208] sm:$0xff]
        %v559 = vld [vmem:[#allocation5 + $0x210] sm:$0xff]
        %v560 = vld [vmem:[#allocation5 + $0x218] sm:$0xff]
        %v561 = vld [vmem:[#allocation5 + $0x220] sm:$0xff]
        %v562 = vld [vmem:[#allocation5 + $0x228] sm:$0xff]
        %v563 = vld [vmem:[#allocation5 + $0x230] sm:$0xff]
        %v564 = vld [vmem:[#allocation5 + $0x238] sm:$0xff]
        %v565 = vld [vmem:[#allocation5 + $0x240] sm:$0xff]
        %v566 = vld [vmem:[#allocation5 + $0x248] sm:$0xff]
        %v567 = vld [vmem:[#allocation5 + $0x250] sm:$0xff]
        %v568 = vld [vmem:[#allocation5 + $0x258] sm:$0xff]
        %v569 = vld [vmem:[#allocation5 + $0x260] sm:$0xff]
        %v570 = vld [vmem:[#allocation5 + $0x268] sm:$0xff]
        %v571 = vld [vmem:[#allocation5 + $0x270] sm:$0xff]
        %v572 = vld [vmem:[#allocation5 + $0x278] sm:$0xff]
        %v573 = vld [vmem:[#allocation5 + $0x280] sm:$0xff]
        %v574 = vld [vmem:[#allocation5 + $0x288] sm:$0xff]
        %v575 = vld [vmem:[#allocation5 + $0x290] sm:$0xff]
        %v576 = vld [vmem:[#allocation5 + $0x298] sm:$0xff]
        %v577 = vld [vmem:[#allocation5 + $0x2a0] sm:$0xff]
        %v578 = vld [vmem:[#allocation5 + $0x2a8] sm:$0xff]
        %v579 = vld [vmem:[#allocation5 + $0x2b0] sm:$0xff]
        %v580 = vld [vmem:[#allocation5 + $0x2b8] sm:$0xff]
        %v581 = vld [vmem:[#allocation5 + $0x2c0] sm:$0xff]
        %v582 = vld [vmem:[#allocation5 + $0x2c8] sm:$0xff]
        %v583 = vld [vmem:[#allocation5 + $0x2d0] sm:$0xff]
        %v584 = vld [vmem:[#allocation5 + $0x2d8] sm:$0xff]
        %v585 = vld [vmem:[#allocation5 + $0x2e0] sm:$0xff]
        %v586 = vld [vmem:[#allocation5 + $0x2e8] sm:$0xff]
        %v587 = vld [vmem:[#allocation5 + $0x2f0] sm:$0xff]
        %v588 = vld [vmem:[#allocation5 + $0x2f8] sm:$0xff]
        %v589 = vld [vmem:[#allocation5 + $0x300] sm:$0xff]
        %v590 = vld [vmem:[#allocation5 + $0x308] sm:$0xff]
        %v591 = vld [vmem:[#allocation5 + $0x310] sm:$0xff]
        %v592 = vld [vmem:[#allocation5 + $0x318] sm:$0xff]
        %v593 = vld [vmem:[#allocation5 + $0x320] sm:$0xff]
        %v594 = vld [vmem:[#allocation5 + $0x328] sm:$0xff]
        %v595 = vld [vmem:[#allocation5 + $0x330] sm:$0xff]
        %v596 = vld [vmem:[#allocation5 + $0x338] sm:$0xff]
        %v597 = vld [vmem:[#allocation5 + $0x340] sm:$0xff]
        %v598 = vld [vmem:[#allocation5 + $0x348] sm:$0xff]
        %v599 = vld [vmem:[#allocation5 + $0x350] sm:$0xff]
        %v600 = vld [vmem:[#allocation5 + $0x358] sm:$0xff]
        %v601 = vld [vmem:[#allocation5 + $0x360] sm:$0xff]
        %v602 = vld [vmem:[#allocation5 + $0x368] sm:$0xff]
        %v603 = vld [vmem:[#allocation5 + $0x370] sm:$0xff]
        %v604 = vld [vmem:[#allocation5 + $0x378] sm:$0xff]
        %v605 = vld [vmem:[#allocation7] sm:$0x1]
        %v607 = vlaneseq
        %v608 = vshrl.u32 %v607, 7
        %v609 = vsub.s32 0, %v608
        %v610 = vrot.slane %v605, %v609
        %612 = vmatprep.subr.mxu0 0.0
        %613 = vmatpush1.msra.mxu0 %v508
        %614 = vmatprep.subr.mxu0 0.0
        %615 = vmatpush1.msra.mxu0 %v507
        %616 = vmatprep.subr.mxu0 0.0
        %617 = vmatpush1.msra.mxu0 %v506
        %618 = vmatprep.subr.mxu0 0.0
        %619 = vmatpush1.msra.mxu0 %v505
        %620 = vmatprep.subr.mxu0 0.0
        %621 = vmatpush1.msra.mxu0 %v504
        %622 = vmatprep.subr.mxu0 0.0
        %623 = vmatpush1.msra.mxu0 %v503
        %624 = vmatprep.subr.mxu0 0.0
        %625 = vmatpush1.msra.mxu0 %v502
        %626 = vmatprep.subr.mxu0 0.0
        %627 = vmatpush1.msra.mxu0 %v501
        %628 = vmatprep.subr.mxu0 0.0
        %629 = vmatpush1.msra.mxu0 %v500
        %630 = vmatprep.subr.mxu0 0.0
        %631 = vmatpush1.msra.mxu0 %v499
        %632 = vmatprep.subr.mxu0 0.0
        %633 = vmatpush1.msra.mxu0 %v498
        %634 = vmatprep.subr.mxu0 0.0
        %635 = vmatpush1.msra.mxu0 %v497
        %636 = vmatprep.subr.mxu0 0.0
        %637 = vmatpush1.msra.mxu0 %v496
        %638 = vmatprep.subr.mxu0 0.0
        %639 = vmatpush1.msra.mxu0 %v495
        %640 = vmatprep.subr.mxu0 0.0
        %641 = vmatpush1.msra.mxu0 %v494
        %642 = vmatprep.subr.mxu0 0.0
        %643 = vmatpush1.msra.mxu0 %v493
        %644 = vmatprep.subr.mxu0 0.0
        %645 = vmatpush2.msra.mxu0 %v524
        %646 = vmatprep.subr.mxu0 0.0
        %647 = vmatpush2.msra.mxu0 %v523
        %648 = vmatprep.subr.mxu0 0.0
        %649 = vmatpush2.msra.mxu0 %v522
        %650 = vmatprep.subr.mxu0 0.0
        %651 = vmatpush2.msra.mxu0 %v521
        %652 = vmatprep.subr.mxu0 0.0
        %653 = vmatpush2.msra.mxu0 %v520
        %654 = vmatprep.subr.mxu0 0.0
        %655 = vmatpush2.msra.mxu0 %v519
        %656 = vmatprep.subr.mxu0 0.0
        %657 = vmatpush2.msra.mxu0 %v518
        %658 = vmatprep.subr.mxu0 0.0
        %659 = vmatpush2.msra.mxu0 %v517
        %660 = vmatprep.subr.mxu0 0.0
        %661 = vmatpush2.msra.mxu0 %v516
        %662 = vmatprep.subr.mxu0 0.0
        %663 = vmatpush2.msra.mxu0 %v515
        %664 = vmatprep.subr.mxu0 0.0
        %665 = vmatpush2.msra.mxu0 %v514
        %666 = vmatprep.subr.mxu0 0.0
        %667 = vmatpush2.msra.mxu0 %v513
        %668 = vmatprep.subr.mxu0 0.0
        %669 = vmatpush2.msra.mxu0 %v512
        %670 = vmatprep.subr.mxu0 0.0
        %671 = vmatpush2.msra.mxu0 %v511
        %672 = vmatprep.subr.mxu0 0.0
        %673 = vmatpush2.msra.mxu0 %v510
        %674 = vmatprep.subr.mxu0 0.0
        %675 = vmatpush2.msra.mxu0 %v509
        %676 = vmatprep.mubr.f32.mxu0 %v382
        %677 = vmatmul.mubr.f32.gmra.mxu0 %v381
        %v678 = vpop.f32.mrf.mxu0
        %v679 = vadd.f32 %v610, %v678
        %v680 = vpop.f32.mrf.mxu0
        %681 = vmatprep.mubr.f32.mxu0 %v389
        %682 = vmatmul.mubr.f32.gmra.mxu0 %v388
        %v683 = vpop.f32.mrf.mxu0
        %v684 = vadd.f32 %v610, %v683
        %v685 = vpop.f32.mrf.mxu0
        %686 = vmatprep.mubr.f32.mxu0 %v396
        %687 = vmatmul.mubr.f32.gmra.mxu0 %v395
        %v688 = vpop.f32.mrf.mxu0
        %v689 = vadd.f32 %v610, %v688
        %v690 = vpop.f32.mrf.mxu0
        %691 = vmatprep.mubr.f32.mxu0 %v403
        %692 = vmatmul.mubr.f32.gmra.mxu0 %v402
        %v693 = vpop.f32.mrf.mxu0
        %v694 = vadd.f32 %v610, %v693
        %v695 = vpop.f32.mrf.mxu0
        %696 = vmatprep.mubr.f32.mxu0 %v410
        %697 = vmatmul.mubr.f32.gmra.mxu0 %v409
        %v698 = vpop.f32.mrf.mxu0
        %v699 = vadd.f32 %v610, %v698
        %v700 = vpop.f32.mrf.mxu0
        %701 = vmatprep.mubr.f32.mxu0 %v417
        %702 = vmatmul.mubr.f32.gmra.mxu0 %v416
        %v703 = vpop.f32.mrf.mxu0
        %v704 = vadd.f32 %v610, %v703
        %v705 = vpop.f32.mrf.mxu0
        %706 = vmatprep.mubr.f32.mxu0 %v424
        %707 = vmatmul.mubr.f32.gmra.mxu0 %v423
        %v708 = vpop.f32.mrf.mxu0
        %v709 = vadd.f32 %v610, %v708
        %v710 = vpop.f32.mrf.mxu0
        %711 = vmatprep.mubr.f32.mxu0 %v431
        %712 = vmatmul.mubr.f32.gmra.mxu0 %v430
        %v713 = vpop.f32.mrf.mxu0
        %v714 = vadd.f32 %v610, %v713
        %v715 = vpop.f32.mrf.mxu0
        %716 = vmatprep.mubr.f32.mxu0 %v438
        %717 = vmatmul.mubr.f32.gmra.mxu0 %v437
        %v718 = vpop.f32.mrf.mxu0
        %v719 = vadd.f32 %v610, %v718
        %v720 = vpop.f32.mrf.mxu0
        %721 = vmatprep.mubr.f32.mxu0 %v445
        %722 = vmatmul.mubr.f32.gmra.mxu0 %v444
        %v723 = vpop.f32.mrf.mxu0
        %v724 = vadd.f32 %v610, %v723
        %v725 = vpop.f32.mrf.mxu0
        %726 = vmatprep.mubr.f32.mxu0 %v452
        %727 = vmatmul.mubr.f32.gmra.mxu0 %v451
        %v728 = vpop.f32.mrf.mxu0
        %v729 = vadd.f32 %v610, %v728
        %v730 = vpop.f32.mrf.mxu0
        %731 = vmatprep.mubr.f32.mxu0 %v459
        %732 = vmatmul.mubr.f32.gmra.mxu0 %v458
        %v733 = vpop.f32.mrf.mxu0
        %v734 = vadd.f32 %v610, %v733
        %v735 = vpop.f32.mrf.mxu0
        %736 = vmatprep.mubr.f32.mxu0 %v466
        %737 = vmatmul.mubr.f32.gmra.mxu0 %v465
        %v738 = vpop.f32.mrf.mxu0
        %v739 = vadd.f32 %v610, %v738
        %v740 = vpop.f32.mrf.mxu0
        %741 = vmatprep.mubr.f32.mxu0 %v473
        %742 = vmatmul.mubr.f32.gmra.mxu0 %v472
        %v743 = vpop.f32.mrf.mxu0
        %v744 = vadd.f32 %v610, %v743
        %v745 = vpop.f32.mrf.mxu0
        %746 = vmatprep.mubr.f32.mxu0 %v480
        %747 = vmatmul.mubr.f32.gmra.mxu0 %v479
        %v748 = vpop.f32.mrf.mxu0
        %v749 = vadd.f32 %v610, %v748
        %v750 = vpop.f32.mrf.mxu0
        %751 = vmatprep.mubr.f32.mxu0 %v487
        %752 = vmatmul.mubr.f32.gmra.mxu0 %v486
        %v753 = vpop.f32.mrf.mxu0
        %v754 = vadd.f32 %v610, %v753
        %v755 = vpop.f32.mrf.mxu0
        %756 = vdwg.mxu0
        %757 = vmatprep.subr.mxu0 0.0
        %758 = vmatpush1.msra.mxu0 %v540
        %759 = vmatprep.subr.mxu0 0.0
        %760 = vmatpush1.msra.mxu0 %v539
        %761 = vmatprep.subr.mxu0 0.0
        %762 = vmatpush1.msra.mxu0 %v538
        %763 = vmatprep.subr.mxu0 0.0
        %764 = vmatpush1.msra.mxu0 %v537
        %765 = vmatprep.subr.mxu0 0.0
        %766 = vmatpush1.msra.mxu0 %v536
        %767 = vmatprep.subr.mxu0 0.0
        %768 = vmatpush1.msra.mxu0 %v535
        %769 = vmatprep.subr.mxu0 0.0
        %770 = vmatpush1.msra.mxu0 %v534
        %771 = vmatprep.subr.mxu0 0.0
        %772 = vmatpush1.msra.mxu0 %v533
        %773 = vmatprep.subr.mxu0 0.0
        %774 = vmatpush1.msra.mxu0 %v532
        %775 = vmatprep.subr.mxu0 0.0
        %776 = vmatpush1.msra.mxu0 %v531
        %777 = vmatprep.subr.mxu0 0.0
        %778 = vmatpush1.msra.mxu0 %v530
        %779 = vmatprep.subr.mxu0 0.0
        %780 = vmatpush1.msra.mxu0 %v529
        %781 = vmatprep.subr.mxu0 0.0
        %782 = vmatpush1.msra.mxu0 %v528
        %783 = vmatprep.subr.mxu0 0.0
        %784 = vmatpush1.msra.mxu0 %v527
        %785 = vmatprep.subr.mxu0 0.0
        %786 = vmatpush1.msra.mxu0 %v526
        %787 = vmatprep.subr.mxu0 0.0
        %788 = vmatpush1.msra.mxu0 %v525
        %789 = vmatprep.subr.mxu0 0.0
        %790 = vmatpush2.msra.mxu0 %v556
        %791 = vmatprep.subr.mxu0 0.0
        %792 = vmatpush2.msra.mxu0 %v555
        %793 = vmatprep.subr.mxu0 0.0
        %794 = vmatpush2.msra.mxu0 %v554
        %795 = vmatprep.subr.mxu0 0.0
        %796 = vmatpush2.msra.mxu0 %v553
        %797 = vmatprep.subr.mxu0 0.0
        %798 = vmatpush2.msra.mxu0 %v552
        %799 = vmatprep.subr.mxu0 0.0
        %800 = vmatpush2.msra.mxu0 %v551
        %801 = vmatprep.subr.mxu0 0.0
        %802 = vmatpush2.msra.mxu0 %v550
        %803 = vmatprep.subr.mxu0 0.0
        %804 = vmatpush2.msra.mxu0 %v549
        %805 = vmatprep.subr.mxu0 0.0
        %806 = vmatpush2.msra.mxu0 %v548
        %807 = vmatprep.subr.mxu0 0.0
        %808 = vmatpush2.msra.mxu0 %v547
        %809 = vmatprep.subr.mxu0 0.0
        %810 = vmatpush2.msra.mxu0 %v546
        %811 = vmatprep.subr.mxu0 0.0
        %812 = vmatpush2.msra.mxu0 %v545
        %813 = vmatprep.subr.mxu0 0.0
        %814 = vmatpush2.msra.mxu0 %v544
        %815 = vmatprep.subr.mxu0 0.0
        %816 = vmatpush2.msra.mxu0 %v543
        %817 = vmatprep.subr.mxu0 0.0
        %818 = vmatpush2.msra.mxu0 %v542
        %819 = vmatprep.subr.mxu0 0.0
        %820 = vmatpush2.msra.mxu0 %v541
        %821 = vmatprep.mubr.f32.mxu0 %v384
        %822 = vmatmul.mubr.f32.gmra.mxu0 %v383
        %v823 = vpop.f32.mrf.mxu0
        %v824 = vadd.f32 %v679, %v823
        %v825 = vpop.f32.mrf.mxu0
        %826 = vmatprep.mubr.f32.mxu0 %v391
        %827 = vmatmul.mubr.f32.gmra.mxu0 %v390
        %v828 = vpop.f32.mrf.mxu0
        %v829 = vadd.f32 %v684, %v828
        %v830 = vpop.f32.mrf.mxu0
        %831 = vmatprep.mubr.f32.mxu0 %v398
        %832 = vmatmul.mubr.f32.gmra.mxu0 %v397
        %v833 = vpop.f32.mrf.mxu0
        %v834 = vadd.f32 %v689, %v833
        %v835 = vpop.f32.mrf.mxu0
        %836 = vmatprep.mubr.f32.mxu0 %v405
        %837 = vmatmul.mubr.f32.gmra.mxu0 %v404
        %v838 = vpop.f32.mrf.mxu0
        %v839 = vadd.f32 %v694, %v838
        %v840 = vpop.f32.mrf.mxu0
        %841 = vmatprep.mubr.f32.mxu0 %v412
        %842 = vmatmul.mubr.f32.gmra.mxu0 %v411
        %v843 = vpop.f32.mrf.mxu0
        %v844 = vadd.f32 %v699, %v843
        %v845 = vpop.f32.mrf.mxu0
        %846 = vmatprep.mubr.f32.mxu0 %v419
        %847 = vmatmul.mubr.f32.gmra.mxu0 %v418
        %v848 = vpop.f32.mrf.mxu0
        %v849 = vadd.f32 %v704, %v848
        %v850 = vpop.f32.mrf.mxu0
        %851 = vmatprep.mubr.f32.mxu0 %v426
        %852 = vmatmul.mubr.f32.gmra.mxu0 %v425
        %v853 = vpop.f32.mrf.mxu0
        %v854 = vadd.f32 %v709, %v853
        %v855 = vpop.f32.mrf.mxu0
        %856 = vmatprep.mubr.f32.mxu0 %v433
        %857 = vmatmul.mubr.f32.gmra.mxu0 %v432
        %v858 = vpop.f32.mrf.mxu0
        %v859 = vadd.f32 %v714, %v858
        %v860 = vpop.f32.mrf.mxu0
        %861 = vmatprep.mubr.f32.mxu0 %v440
        %862 = vmatmul.mubr.f32.gmra.mxu0 %v439
        %v863 = vpop.f32.mrf.mxu0
        %v864 = vadd.f32 %v719, %v863
        %v865 = vpop.f32.mrf.mxu0
        %866 = vmatprep.mubr.f32.mxu0 %v447
        %867 = vmatmul.mubr.f32.gmra.mxu0 %v446
        %v868 = vpop.f32.mrf.mxu0
        %v869 = vadd.f32 %v724, %v868
        %v870 = vpop.f32.mrf.mxu0
        %871 = vmatprep.mubr.f32.mxu0 %v454
        %872 = vmatmul.mubr.f32.gmra.mxu0 %v453
        %v873 = vpop.f32.mrf.mxu0
        %v874 = vadd.f32 %v729, %v873
        %v875 = vpop.f32.mrf.mxu0
        %876 = vmatprep.mubr.f32.mxu0 %v461
        %877 = vmatmul.mubr.f32.gmra.mxu0 %v460
        %v878 = vpop.f32.mrf.mxu0
        %v879 = vadd.f32 %v734, %v878
        %v880 = vpop.f32.mrf.mxu0
        %881 = vmatprep.mubr.f32.mxu0 %v468
        %882 = vmatmul.mubr.f32.gmra.mxu0 %v467
        %v883 = vpop.f32.mrf.mxu0
        %v884 = vadd.f32 %v739, %v883
        %v885 = vpop.f32.mrf.mxu0
        %886 = vmatprep.mubr.f32.mxu0 %v475
        %887 = vmatmul.mubr.f32.gmra.mxu0 %v474
        %v888 = vpop.f32.mrf.mxu0
        %v889 = vadd.f32 %v744, %v888
        %v890 = vpop.f32.mrf.mxu0
        %891 = vmatprep.mubr.f32.mxu0 %v482
        %892 = vmatmul.mubr.f32.gmra.mxu0 %v481
        %v893 = vpop.f32.mrf.mxu0
        %v894 = vadd.f32 %v749, %v893
        %v895 = vpop.f32.mrf.mxu0
        %896 = vmatprep.mubr.f32.mxu0 %v489
        %897 = vmatmul.mubr.f32.gmra.mxu0 %v488
        %v898 = vpop.f32.mrf.mxu0
        %v899 = vadd.f32 %v754, %v898
        %v900 = vpop.f32.mrf.mxu0
        %901 = vdwg.mxu0
        %902 = vmatprep.subr.mxu0 0.0
        %903 = vmatpush1.msra.mxu0 %v572
        %904 = vmatprep.subr.mxu0 0.0
        %905 = vmatpush1.msra.mxu0 %v571
        %906 = vmatprep.subr.mxu0 0.0
        %907 = vmatpush1.msra.mxu0 %v570
        %908 = vmatprep.subr.mxu0 0.0
        %909 = vmatpush1.msra.mxu0 %v569
        %910 = vmatprep.subr.mxu0 0.0
        %911 = vmatpush1.msra.mxu0 %v568
        %912 = vmatprep.subr.mxu0 0.0
        %913 = vmatpush1.msra.mxu0 %v567
        %914 = vmatprep.subr.mxu0 0.0
        %915 = vmatpush1.msra.mxu0 %v566
        %916 = vmatprep.subr.mxu0 0.0
        %917 = vmatpush1.msra.mxu0 %v565
        %918 = vmatprep.subr.mxu0 0.0
        %919 = vmatpush1.msra.mxu0 %v564
        %920 = vmatprep.subr.mxu0 0.0
        %921 = vmatpush1.msra.mxu0 %v563
        %922 = vmatprep.subr.mxu0 0.0
        %923 = vmatpush1.msra.mxu0 %v562
        %924 = vmatprep.subr.mxu0 0.0
        %925 = vmatpush1.msra.mxu0 %v561
        %926 = vmatprep.subr.mxu0 0.0
        %927 = vmatpush1.msra.mxu0 %v560
        %928 = vmatprep.subr.mxu0 0.0
        %929 = vmatpush1.msra.mxu0 %v559
        %930 = vmatprep.subr.mxu0 0.0
        %931 = vmatpush1.msra.mxu0 %v558
        %932 = vmatprep.subr.mxu0 0.0
        %933 = vmatpush1.msra.mxu0 %v557
        %934 = vmatprep.subr.mxu0 0.0
        %935 = vmatpush2.msra.mxu0 %v588
        %936 = vmatprep.subr.mxu0 0.0
        %937 = vmatpush2.msra.mxu0 %v587
        %938 = vmatprep.subr.mxu0 0.0
        %939 = vmatpush2.msra.mxu0 %v586
        %940 = vmatprep.subr.mxu0 0.0
        %941 = vmatpush2.msra.mxu0 %v585
        %942 = vmatprep.subr.mxu0 0.0
        %943 = vmatpush2.msra.mxu0 %v584
        %944 = vmatprep.subr.mxu0 0.0
        %945 = vmatpush2.msra.mxu0 %v583
        %946 = vmatprep.subr.mxu0 0.0
        %947 = vmatpush2.msra.mxu0 %v582
        %948 = vmatprep.subr.mxu0 0.0
        %949 = vmatpush2.msra.mxu0 %v581
        %950 = vmatprep.subr.mxu0 0.0
        %951 = vmatpush2.msra.mxu0 %v580
        %952 = vmatprep.subr.mxu0 0.0
        %953 = vmatpush2.msra.mxu0 %v579
        %954 = vmatprep.subr.mxu0 0.0
        %955 = vmatpush2.msra.mxu0 %v578
        %956 = vmatprep.subr.mxu0 0.0
        %957 = vmatpush2.msra.mxu0 %v577
        %958 = vmatprep.subr.mxu0 0.0
        %959 = vmatpush2.msra.mxu0 %v576
        %960 = vmatprep.subr.mxu0 0.0
        %961 = vmatpush2.msra.mxu0 %v575
        %962 = vmatprep.subr.mxu0 0.0
        %963 = vmatpush2.msra.mxu0 %v574
        %964 = vmatprep.subr.mxu0 0.0
        %965 = vmatpush2.msra.mxu0 %v573
        %966 = vmatprep.mubr.f32.mxu0 %v386
        %967 = vmatmul.mubr.f32.gmra.mxu0 %v385
        %v968 = vpop.f32.mrf.mxu0
        %v969 = vadd.f32 %v824, %v968
        %v970 = vpop.f32.mrf.mxu0
        %971 = vmatprep.mubr.f32.mxu0 %v393
        %972 = vmatmul.mubr.f32.gmra.mxu0 %v392
        %v973 = vpop.f32.mrf.mxu0
        %v974 = vadd.f32 %v829, %v973
        %v975 = vpop.f32.mrf.mxu0
        %976 = vmatprep.mubr.f32.mxu0 %v400
        %977 = vmatmul.mubr.f32.gmra.mxu0 %v399
        %v978 = vpop.f32.mrf.mxu0
        %v979 = vadd.f32 %v834, %v978
        %v980 = vpop.f32.mrf.mxu0
        %981 = vmatprep.mubr.f32.mxu0 %v407
        %982 = vmatmul.mubr.f32.gmra.mxu0 %v406
        %v983 = vpop.f32.mrf.mxu0
        %v984 = vadd.f32 %v839, %v983
        %v985 = vpop.f32.mrf.mxu0
        %986 = vmatprep.mubr.f32.mxu0 %v414
        %987 = vmatmul.mubr.f32.gmra.mxu0 %v413
        %v988 = vpop.f32.mrf.mxu0
        %v989 = vadd.f32 %v844, %v988
        %v990 = vpop.f32.mrf.mxu0
        %991 = vmatprep.mubr.f32.mxu0 %v421
        %992 = vmatmul.mubr.f32.gmra.mxu0 %v420
        %v993 = vpop.f32.mrf.mxu0
        %v994 = vadd.f32 %v849, %v993
        %v995 = vpop.f32.mrf.mxu0
        %996 = vmatprep.mubr.f32.mxu0 %v428
        %997 = vmatmul.mubr.f32.gmra.mxu0 %v427
        %v998 = vpop.f32.mrf.mxu0
        %v999 = vadd.f32 %v854, %v998
        %v1000 = vpop.f32.mrf.mxu0
        %1001 = vmatprep.mubr.f32.mxu0 %v435
        %1002 = vmatmul.mubr.f32.gmra.mxu0 %v434
        %v1003 = vpop.f32.mrf.mxu0
        %v1004 = vadd.f32 %v859, %v1003
        %v1005 = vpop.f32.mrf.mxu0
        %1006 = vmatprep.mubr.f32.mxu0 %v442
        %1007 = vmatmul.mubr.f32.gmra.mxu0 %v441
        %v1008 = vpop.f32.mrf.mxu0
        %v1009 = vadd.f32 %v864, %v1008
        %v1010 = vpop.f32.mrf.mxu0
        %1011 = vmatprep.mubr.f32.mxu0 %v449
        %1012 = vmatmul.mubr.f32.gmra.mxu0 %v448
        %v1013 = vpop.f32.mrf.mxu0
        %v1014 = vadd.f32 %v869, %v1013
        %v1015 = vpop.f32.mrf.mxu0
        %1016 = vmatprep.mubr.f32.mxu0 %v456
        %1017 = vmatmul.mubr.f32.gmra.mxu0 %v455
        %v1018 = vpop.f32.mrf.mxu0
        %v1019 = vadd.f32 %v874, %v1018
        %v1020 = vpop.f32.mrf.mxu0
        %1021 = vmatprep.mubr.f32.mxu0 %v463
        %1022 = vmatmul.mubr.f32.gmra.mxu0 %v462
        %v1023 = vpop.f32.mrf.mxu0
        %v1024 = vadd.f32 %v879, %v1023
        %v1025 = vpop.f32.mrf.mxu0
        %1026 = vmatprep.mubr.f32.mxu0 %v470
        %1027 = vmatmul.mubr.f32.gmra.mxu0 %v469
        %v1028 = vpop.f32.mrf.mxu0
        %v1029 = vadd.f32 %v884, %v1028
        %v1030 = vpop.f32.mrf.mxu0
        %1031 = vmatprep.mubr.f32.mxu0 %v477
        %1032 = vmatmul.mubr.f32.gmra.mxu0 %v476
        %v1033 = vpop.f32.mrf.mxu0
        %v1034 = vadd.f32 %v889, %v1033
        %v1035 = vpop.f32.mrf.mxu0
        %1036 = vmatprep.mubr.f32.mxu0 %v484
        %1037 = vmatmul.mubr.f32.gmra.mxu0 %v483
        %v1038 = vpop.f32.mrf.mxu0
        %v1039 = vadd.f32 %v894, %v1038
        %v1040 = vpop.f32.mrf.mxu0
        %1041 = vmatprep.mubr.f32.mxu0 %v491
        %1042 = vmatmul.mubr.f32.gmra.mxu0 %v490
        %v1043 = vpop.f32.mrf.mxu0
        %v1044 = vadd.f32 %v899, %v1043
        %v1045 = vpop.f32.mrf.mxu0
        %1046 = vdwg.mxu0
        %1047 = vmatprep.subr.mxu0 0.0
        %1048 = vmatpush1.msra.mxu0 %v604
        %1049 = vmatprep.subr.mxu0 0.0
        %1050 = vmatpush1.msra.mxu0 %v603
        %1051 = vmatprep.subr.mxu0 0.0
        %1052 = vmatpush1.msra.mxu0 %v602
        %1053 = vmatprep.subr.mxu0 0.0
        %1054 = vmatpush1.msra.mxu0 %v601
        %1055 = vmatprep.subr.mxu0 0.0
        %1056 = vmatpush1.msra.mxu0 %v600
        %1057 = vmatprep.subr.mxu0 0.0
        %1058 = vmatpush1.msra.mxu0 %v599
        %1059 = vmatprep.subr.mxu0 0.0
        %1060 = vmatpush1.msra.mxu0 %v598
        %1061 = vmatprep.subr.mxu0 0.0
        %1062 = vmatpush1.msra.mxu0 %v597
        %1063 = vmatprep.subr.mxu0 0.0
        %1064 = vmatpush1.msra.mxu0 %v596
        %1065 = vmatprep.subr.mxu0 0.0
        %1066 = vmatpush1.msra.mxu0 %v595
        %1067 = vmatprep.subr.mxu0 0.0
        %1068 = vmatpush1.msra.mxu0 %v594
        %1069 = vmatprep.subr.mxu0 0.0
        %1070 = vmatpush1.msra.mxu0 %v593
        %1071 = vmatprep.subr.mxu0 0.0
        %1072 = vmatpush1.msra.mxu0 %v592
        %1073 = vmatprep.subr.mxu0 0.0
        %1074 = vmatpush1.msra.mxu0 %v591
        %1075 = vmatprep.subr.mxu0 0.0
        %1076 = vmatpush1.msra.mxu0 %v590
        %1077 = vmatprep.subr.mxu0 0.0
        %1078 = vmatpush1.msra.mxu0 %v589
        %1079 = vmatprep.subr.mxu0 0.0
        %1080 = vmatpush2.msra.mxu0 0.0
        %1081 = vmatprep.subr.mxu0 0.0
        %1082 = vmatpush2.msra.mxu0 0.0
        %1083 = vmatprep.subr.mxu0 0.0
        %1084 = vmatpush2.msra.mxu0 0.0
        %1085 = vmatprep.subr.mxu0 0.0
        %1086 = vmatpush2.msra.mxu0 0.0
        %1087 = vmatprep.subr.mxu0 0.0
        %1088 = vmatpush2.msra.mxu0 0.0
        %1089 = vmatprep.subr.mxu0 0.0
        %1090 = vmatpush2.msra.mxu0 0.0
        %1091 = vmatprep.subr.mxu0 0.0
        %1092 = vmatpush2.msra.mxu0 0.0
        %1093 = vmatprep.subr.mxu0 0.0
        %1094 = vmatpush2.msra.mxu0 0.0
        %1095 = vmatprep.subr.mxu0 0.0
        %1096 = vmatpush2.msra.mxu0 0.0
        %1097 = vmatprep.subr.mxu0 0.0
        %1098 = vmatpush2.msra.mxu0 0.0
        %1099 = vmatprep.subr.mxu0 0.0
        %1100 = vmatpush2.msra.mxu0 0.0
        %1101 = vmatprep.subr.mxu0 0.0
        %1102 = vmatpush2.msra.mxu0 0.0
        %1103 = vmatprep.subr.mxu0 0.0
        %1104 = vmatpush2.msra.mxu0 0.0
        %1105 = vmatprep.subr.mxu0 0.0
        %1106 = vmatpush2.msra.mxu0 0.0
        %1107 = vmatprep.subr.mxu0 0.0
        %1108 = vmatpush2.msra.mxu0 0.0
        %1109 = vmatprep.subr.mxu0 0.0
        %1110 = vmatpush2.msra.mxu0 0.0
        %1111 = vmatprep.mubr.f32.mxu0 0.0
        %1112 = vmatmul.mubr.f32.gmra.mxu0 %v387
        %v1113 = vpop.f32.mrf.mxu0
        %v1114 = vadd.f32 %v969, %v1113
        %v1115 = vpop.f32.mrf.mxu0
        %1116 = vmatprep.mubr.f32.mxu0 0.0
        %1117 = vmatmul.mubr.f32.gmra.mxu0 %v394
        %v1118 = vpop.f32.mrf.mxu0
        %v1119 = vadd.f32 %v974, %v1118
        %v1120 = vpop.f32.mrf.mxu0
        %1121 = vmatprep.mubr.f32.mxu0 0.0
        %1122 = vmatmul.mubr.f32.gmra.mxu0 %v401
        %v1123 = vpop.f32.mrf.mxu0
        %v1124 = vadd.f32 %v979, %v1123
        %v1125 = vpop.f32.mrf.mxu0
        %1126 = vmatprep.mubr.f32.mxu0 0.0
        %1127 = vmatmul.mubr.f32.gmra.mxu0 %v408
        %v1128 = vpop.f32.mrf.mxu0
        %v1129 = vadd.f32 %v984, %v1128
        %v1130 = vpop.f32.mrf.mxu0
        %1131 = vmatprep.mubr.f32.mxu0 0.0
        %1132 = vmatmul.mubr.f32.gmra.mxu0 %v415
        %v1133 = vpop.f32.mrf.mxu0
        %v1134 = vadd.f32 %v989, %v1133
        %v1135 = vpop.f32.mrf.mxu0
        %1136 = vmatprep.mubr.f32.mxu0 0.0
        %1137 = vmatmul.mubr.f32.gmra.mxu0 %v422
        %v1138 = vpop.f32.mrf.mxu0
        %v1139 = vadd.f32 %v994, %v1138
        %v1140 = vpop.f32.mrf.mxu0
        %1141 = vmatprep.mubr.f32.mxu0 0.0
        %1142 = vmatmul.mubr.f32.gmra.mxu0 %v429
        %v1143 = vpop.f32.mrf.mxu0
        %v1144 = vadd.f32 %v999, %v1143
        %v1145 = vpop.f32.mrf.mxu0
        %1146 = vmatprep.mubr.f32.mxu0 0.0
        %1147 = vmatmul.mubr.f32.gmra.mxu0 %v436
        %v1148 = vpop.f32.mrf.mxu0
        %v1149 = vadd.f32 %v1004, %v1148
        %v1150 = vpop.f32.mrf.mxu0
        %1151 = vmatprep.mubr.f32.mxu0 0.0
        %1152 = vmatmul.mubr.f32.gmra.mxu0 %v443
        %v1153 = vpop.f32.mrf.mxu0
        %v1154 = vadd.f32 %v1009, %v1153
        %v1155 = vpop.f32.mrf.mxu0
        %1156 = vmatprep.mubr.f32.mxu0 0.0
        %1157 = vmatmul.mubr.f32.gmra.mxu0 %v450
        %v1158 = vpop.f32.mrf.mxu0
        %v1159 = vadd.f32 %v1014, %v1158
        %v1160 = vpop.f32.mrf.mxu0
        %1161 = vmatprep.mubr.f32.mxu0 0.0
        %1162 = vmatmul.mubr.f32.gmra.mxu0 %v457
        %v1163 = vpop.f32.mrf.mxu0
        %v1164 = vadd.f32 %v1019, %v1163
        %v1165 = vpop.f32.mrf.mxu0
        %1166 = vmatprep.mubr.f32.mxu0 0.0
        %1167 = vmatmul.mubr.f32.gmra.mxu0 %v464
        %v1168 = vpop.f32.mrf.mxu0
        %v1169 = vadd.f32 %v1024, %v1168
        %v1170 = vpop.f32.mrf.mxu0
        %1171 = vmatprep.mubr.f32.mxu0 0.0
        %1172 = vmatmul.mubr.f32.gmra.mxu0 %v471
        %v1173 = vpop.f32.mrf.mxu0
        %v1174 = vadd.f32 %v1029, %v1173
        %v1175 = vpop.f32.mrf.mxu0
        %1176 = vmatprep.mubr.f32.mxu0 0.0
        %1177 = vmatmul.mubr.f32.gmra.mxu0 %v478
        %v1178 = vpop.f32.mrf.mxu0
        %v1179 = vadd.f32 %v1034, %v1178
        %v1180 = vpop.f32.mrf.mxu0
        %1181 = vmatprep.mubr.f32.mxu0 0.0
        %1182 = vmatmul.mubr.f32.gmra.mxu0 %v485
        %v1183 = vpop.f32.mrf.mxu0
        %v1184 = vadd.f32 %v1039, %v1183
        %v1185 = vpop.f32.mrf.mxu0
        %1186 = vmatprep.mubr.f32.mxu0 0.0
        %1187 = vmatmul.mubr.f32.gmra.mxu0 %v492
        %v1188 = vpop.f32.mrf.mxu0
        %v1189 = vadd.f32 %v1044, %v1188
        %v1190 = vpop.f32.mrf.mxu0
        %1191 = vdwg.mxu0
        %v1192 = vmax.f32 %v1114, 0.0
        %v1193 = vmax.f32 %v1119, 0.0
        %v1194 = vmax.f32 %v1124, 0.0
        %v1195 = vmax.f32 %v1129, 0.0
        %v1196 = vmax.f32 %v1134, 0.0
        %v1197 = vmax.f32 %v1139, 0.0
        %v1198 = vmax.f32 %v1144, 0.0
        %v1199 = vmax.f32 %v1149, 0.0
        %v1200 = vmax.f32 %v1154, 0.0
        %v1201 = vmax.f32 %v1159, 0.0
        %v1202 = vmax.f32 %v1164, 0.0
        %v1203 = vmax.f32 %v1169, 0.0
        %v1204 = vmax.f32 %v1174, 0.0
        %v1205 = vmax.f32 %v1179, 0.0
        %v1206 = vmax.f32 %v1184, 0.0
        %v1207 = vmax.f32 %v1189, 0.0
        %v1208 = vld [vmem:[#allocation8] sm:$0xff]
        %v1209 = vld [vmem:[#allocation8 + $0x8] sm:$0xff]
        %v1210 = vld [vmem:[#allocation8 + $0x10] sm:$0xff]
        %v1211 = vld [vmem:[#allocation8 + $0x18] sm:$0xff]
        %v1212 = vld [vmem:[#allocation8 + $0x20] sm:$0xff]
        %v1213 = vld [vmem:[#allocation8 + $0x28] sm:$0xff]
        %v1214 = vld [vmem:[#allocation8 + $0x30] sm:$0xff]
        %v1215 = vld [vmem:[#allocation8 + $0x38] sm:$0xff]
        %v1216 = vld [vmem:[#allocation8 + $0x40] sm:$0xff]
        %v1217 = vld [vmem:[#allocation8 + $0x48] sm:$0xff]
        %v1218 = vld [vmem:[#allocation8 + $0x50] sm:$0xff]
        %v1219 = vld [vmem:[#allocation8 + $0x58] sm:$0xff]
        %v1220 = vld [vmem:[#allocation8 + $0x60] sm:$0xff]
        %v1221 = vld [vmem:[#allocation8 + $0x68] sm:$0xff]
        %v1222 = vld [vmem:[#allocation8 + $0x70] sm:$0xff]
        %v1223 = vld [vmem:[#allocation8 + $0x78] sm:$0xff]
        %v1224 = vld [vmem:[#allocation10] sm:$0x1]
        %v1226 = vlaneseq
        %v1227 = vshrl.u32 %v1226, 7
        %v1228 = vsub.s32 0, %v1227
        %v1229 = vrot.slane %v1224, %v1228
        %1231 = vmatprep.subr.mxu0 0.0
        %1232 = vmatpush1.msra.mxu0 %v1223
        %1233 = vmatprep.subr.mxu0 0.0
        %1234 = vmatpush1.msra.mxu0 %v1222
        %1235 = vmatprep.subr.mxu0 0.0
        %1236 = vmatpush1.msra.mxu0 %v1221
        %1237 = vmatprep.subr.mxu0 0.0
        %1238 = vmatpush1.msra.mxu0 %v1220
        %1239 = vmatprep.subr.mxu0 0.0
        %1240 = vmatpush1.msra.mxu0 %v1219
        %1241 = vmatprep.subr.mxu0 0.0
        %1242 = vmatpush1.msra.mxu0 %v1218
        %1243 = vmatprep.subr.mxu0 0.0
        %1244 = vmatpush1.msra.mxu0 %v1217
        %1245 = vmatprep.subr.mxu0 0.0
        %1246 = vmatpush1.msra.mxu0 %v1216
        %1247 = vmatprep.subr.mxu0 0.0
        %1248 = vmatpush1.msra.mxu0 %v1215
        %1249 = vmatprep.subr.mxu0 0.0
        %1250 = vmatpush1.msra.mxu0 %v1214
        %1251 = vmatprep.subr.mxu0 0.0
        %1252 = vmatpush1.msra.mxu0 %v1213
        %1253 = vmatprep.subr.mxu0 0.0
        %1254 = vmatpush1.msra.mxu0 %v1212
        %1255 = vmatprep.subr.mxu0 0.0
        %1256 = vmatpush1.msra.mxu0 %v1211
        %1257 = vmatprep.subr.mxu0 0.0
        %1258 = vmatpush1.msra.mxu0 %v1210
        %1259 = vmatprep.subr.mxu0 0.0
        %1260 = vmatpush1.msra.mxu0 %v1209
        %1261 = vmatprep.subr.mxu0 0.0
        %1262 = vmatpush1.msra.mxu0 %v1208
        %1263 = vmatprep.subr.mxu0 0.0
        %1264 = vmatpush2.msra.mxu0 0.0
        %1265 = vmatprep.subr.mxu0 0.0
        %1266 = vmatpush2.msra.mxu0 0.0
        %1267 = vmatprep.subr.mxu0 0.0
        %1268 = vmatpush2.msra.mxu0 0.0
        %1269 = vmatprep.subr.mxu0 0.0
        %1270 = vmatpush2.msra.mxu0 0.0
        %1271 = vmatprep.subr.mxu0 0.0
        %1272 = vmatpush2.msra.mxu0 0.0
        %1273 = vmatprep.subr.mxu0 0.0
        %1274 = vmatpush2.msra.mxu0 0.0
        %1275 = vmatprep.subr.mxu0 0.0
        %1276 = vmatpush2.msra.mxu0 0.0
        %1277 = vmatprep.subr.mxu0 0.0
        %1278 = vmatpush2.msra.mxu0 0.0
        %1279 = vmatprep.subr.mxu0 0.0
        %1280 = vmatpush2.msra.mxu0 0.0
        %1281 = vmatprep.subr.mxu0 0.0
        %1282 = vmatpush2.msra.mxu0 0.0
        %1283 = vmatprep.subr.mxu0 0.0
        %1284 = vmatpush2.msra.mxu0 0.0
        %1285 = vmatprep.subr.mxu0 0.0
        %1286 = vmatpush2.msra.mxu0 0.0
        %1287 = vmatprep.subr.mxu0 0.0
        %1288 = vmatpush2.msra.mxu0 0.0
        %1289 = vmatprep.subr.mxu0 0.0
        %1290 = vmatpush2.msra.mxu0 0.0
        %1291 = vmatprep.subr.mxu0 0.0
        %1292 = vmatpush2.msra.mxu0 0.0
        %1293 = vmatprep.subr.mxu0 0.0
        %1294 = vmatpush2.msra.mxu0 0.0
        %1295 = vmatprep.mubr.f32.mxu0 0.0
        %1296 = vmatmul.mubr.f32.gmra.mxu0 %v1192
        %v1297 = vpop.f32.mrf.mxu0
        %v1298 = vadd.f32 %v1229, %v1297
        %v1299 = vpop.f32.mrf.mxu0
        %1300 = vmatprep.mubr.f32.mxu0 0.0
        %1301 = vmatmul.mubr.f32.gmra.mxu0 %v1193
        %v1302 = vpop.f32.mrf.mxu0
        %v1303 = vadd.f32 %v1229, %v1302
        %v1304 = vpop.f32.mrf.mxu0
        %1305 = vmatprep.mubr.f32.mxu0 0.0
        %1306 = vmatmul.mubr.f32.gmra.mxu0 %v1194
        %v1307 = vpop.f32.mrf.mxu0
        %v1308 = vadd.f32 %v1229, %v1307
        %v1309 = vpop.f32.mrf.mxu0
        %1310 = vmatprep.mubr.f32.mxu0 0.0
        %1311 = vmatmul.mubr.f32.gmra.mxu0 %v1195
        %v1312 = vpop.f32.mrf.mxu0
        %v1313 = vadd.f32 %v1229, %v1312
        %v1314 = vpop.f32.mrf.mxu0
        %1315 = vmatprep.mubr.f32.mxu0 0.0
        %1316 = vmatmul.mubr.f32.gmra.mxu0 %v1196
        %v1317 = vpop.f32.mrf.mxu0
        %v1318 = vadd.f32 %v1229, %v1317
        %v1319 = vpop.f32.mrf.mxu0
        %1320 = vmatprep.mubr.f32.mxu0 0.0
        %1321 = vmatmul.mubr.f32.gmra.mxu0 %v1197
        %v1322 = vpop.f32.mrf.mxu0
        %v1323 = vadd.f32 %v1229, %v1322
        %v1324 = vpop.f32.mrf.mxu0
        %1325 = vmatprep.mubr.f32.mxu0 0.0
        %1326 = vmatmul.mubr.f32.gmra.mxu0 %v1198
        %v1327 = vpop.f32.mrf.mxu0
        %v1328 = vadd.f32 %v1229, %v1327
        %v1329 = vpop.f32.mrf.mxu0
        %1330 = vmatprep.mubr.f32.mxu0 0.0
        %1331 = vmatmul.mubr.f32.gmra.mxu0 %v1199
        %v1332 = vpop.f32.mrf.mxu0
        %v1333 = vadd.f32 %v1229, %v1332
        %v1334 = vpop.f32.mrf.mxu0
        %1335 = vmatprep.mubr.f32.mxu0 0.0
        %1336 = vmatmul.mubr.f32.gmra.mxu0 %v1200
        %v1337 = vpop.f32.mrf.mxu0
        %v1338 = vadd.f32 %v1229, %v1337
        %v1339 = vpop.f32.mrf.mxu0
        %1340 = vmatprep.mubr.f32.mxu0 0.0
        %1341 = vmatmul.mubr.f32.gmra.mxu0 %v1201
        %v1342 = vpop.f32.mrf.mxu0
        %v1343 = vadd.f32 %v1229, %v1342
        %v1344 = vpop.f32.mrf.mxu0
        %1345 = vmatprep.mubr.f32.mxu0 0.0
        %1346 = vmatmul.mubr.f32.gmra.mxu0 %v1202
        %v1347 = vpop.f32.mrf.mxu0
        %v1348 = vadd.f32 %v1229, %v1347
        %v1349 = vpop.f32.mrf.mxu0
        %1350 = vmatprep.mubr.f32.mxu0 0.0
        %1351 = vmatmul.mubr.f32.gmra.mxu0 %v1203
        %v1352 = vpop.f32.mrf.mxu0
        %v1353 = vadd.f32 %v1229, %v1352
        %v1354 = vpop.f32.mrf.mxu0
        %1355 = vmatprep.mubr.f32.mxu0 0.0
        %1356 = vmatmul.mubr.f32.gmra.mxu0 %v1204
        %v1357 = vpop.f32.mrf.mxu0
        %v1358 = vadd.f32 %v1229, %v1357
        %v1359 = vpop.f32.mrf.mxu0
        %1360 = vmatprep.mubr.f32.mxu0 0.0
        %1361 = vmatmul.mubr.f32.gmra.mxu0 %v1205
        %v1362 = vpop.f32.mrf.mxu0
        %v1363 = vadd.f32 %v1229, %v1362
        %v1364 = vpop.f32.mrf.mxu0
        %1365 = vmatprep.mubr.f32.mxu0 0.0
        %1366 = vmatmul.mubr.f32.gmra.mxu0 %v1206
        %v1367 = vpop.f32.mrf.mxu0
        %v1368 = vadd.f32 %v1229, %v1367
        %v1369 = vpop.f32.mrf.mxu0
        %1370 = vmatprep.mubr.f32.mxu0 0.0
        %1371 = vmatmul.mubr.f32.gmra.mxu0 %v1207
        %v1372 = vpop.f32.mrf.mxu0
        %v1373 = vadd.f32 %v1229, %v1372
        %v1374 = vpop.f32.mrf.mxu0
        %1375 = vdwg.mxu0
        %v1376 = vmax.f32 %v1298, 0.0
        %v1377 = vmax.f32 %v1303, 0.0
        %v1378 = vmax.f32 %v1308, 0.0
        %v1379 = vmax.f32 %v1313, 0.0
        %v1380 = vmax.f32 %v1318, 0.0
        %v1381 = vmax.f32 %v1323, 0.0
        %v1382 = vmax.f32 %v1328, 0.0
        %v1383 = vmax.f32 %v1333, 0.0
        %v1384 = vmax.f32 %v1338, 0.0
        %v1385 = vmax.f32 %v1343, 0.0
        %v1386 = vmax.f32 %v1348, 0.0
        %v1387 = vmax.f32 %v1353, 0.0
        %v1388 = vmax.f32 %v1358, 0.0
        %v1389 = vmax.f32 %v1363, 0.0
        %v1390 = vmax.f32 %v1368, 0.0
        %v1391 = vmax.f32 %v1373, 0.0
        %v1392 = vld [vmem:[#allocation11] sm:$0xff]
        %v1393 = vld [vmem:[#allocation11 + $0x8] sm:$0xff]
        %v1394 = vld [vmem:[#allocation11 + $0x10] sm:$0xff]
        %v1395 = vld [vmem:[#allocation11 + $0x18] sm:$0xff]
        %v1396 = vld [vmem:[#allocation11 + $0x20] sm:$0xff]
        %v1397 = vld [vmem:[#allocation11 + $0x28] sm:$0xff]
        %v1398 = vld [vmem:[#allocation11 + $0x30] sm:$0xff]
        %v1399 = vld [vmem:[#allocation11 + $0x38] sm:$0xff]
        %v1400 = vld [vmem:[#allocation11 + $0x40] sm:$0xff]
        %v1401 = vld [vmem:[#allocation11 + $0x48] sm:$0xff]
        %v1402 = vld [vmem:[#allocation11 + $0x50] sm:$0xff]
        %v1403 = vld [vmem:[#allocation11 + $0x58] sm:$0xff]
        %v1404 = vld [vmem:[#allocation11 + $0x60] sm:$0xff]
        %v1405 = vld [vmem:[#allocation11 + $0x68] sm:$0xff]
        %v1406 = vld [vmem:[#allocation11 + $0x70] sm:$0xff]
        %v1407 = vld [vmem:[#allocation11 + $0x78] sm:$0xff]
        %v1408 = vld [vmem:[#allocation13] sm:$0x1]
        %v1410 = vlaneseq
        %v1411 = vshrl.u32 %v1410, 7
        %v1412 = vsub.s32 0, %v1411
        %v1413 = vrot.slane %v1408, %v1412
        %1415 = vmatprep.subr.mxu0 0.0
        %1416 = vmatpush1.msra.mxu0 %v1407
        %1417 = vmatprep.subr.mxu0 0.0
        %1418 = vmatpush1.msra.mxu0 %v1406
        %1419 = vmatprep.subr.mxu0 0.0
        %1420 = vmatpush1.msra.mxu0 %v1405
        %1421 = vmatprep.subr.mxu0 0.0
        %1422 = vmatpush1.msra.mxu0 %v1404
        %1423 = vmatprep.subr.mxu0 0.0
        %1424 = vmatpush1.msra.mxu0 %v1403
        %1425 = vmatprep.subr.mxu0 0.0
        %1426 = vmatpush1.msra.mxu0 %v1402
        %1427 = vmatprep.subr.mxu0 0.0
        %1428 = vmatpush1.msra.mxu0 %v1401
        %1429 = vmatprep.subr.mxu0 0.0
        %1430 = vmatpush1.msra.mxu0 %v1400
        %1431 = vmatprep.subr.mxu0 0.0
        %1432 = vmatpush1.msra.mxu0 %v1399
        %1433 = vmatprep.subr.mxu0 0.0
        %1434 = vmatpush1.msra.mxu0 %v1398
        %1435 = vmatprep.subr.mxu0 0.0
        %1436 = vmatpush1.msra.mxu0 %v1397
        %1437 = vmatprep.subr.mxu0 0.0
        %1438 = vmatpush1.msra.mxu0 %v1396
        %1439 = vmatprep.subr.mxu0 0.0
        %1440 = vmatpush1.msra.mxu0 %v1395
        %1441 = vmatprep.subr.mxu0 0.0
        %1442 = vmatpush1.msra.mxu0 %v1394
        %1443 = vmatprep.subr.mxu0 0.0
        %1444 = vmatpush1.msra.mxu0 %v1393
        %1445 = vmatprep.subr.mxu0 0.0
        %1446 = vmatpush1.msra.mxu0 %v1392
        %1447 = vmatprep.subr.mxu0 0.0
        %1448 = vmatpush2.msra.mxu0 0.0
        %1449 = vmatprep.subr.mxu0 0.0
        %1450 = vmatpush2.msra.mxu0 0.0
        %1451 = vmatprep.subr.mxu0 0.0
        %1452 = vmatpush2.msra.mxu0 0.0
        %1453 = vmatprep.subr.mxu0 0.0
        %1454 = vmatpush2.msra.mxu0 0.0
        %1455 = vmatprep.subr.mxu0 0.0
        %1456 = vmatpush2.msra.mxu0 0.0
        %1457 = vmatprep.subr.mxu0 0.0
        %1458 = vmatpush2.msra.mxu0 0.0
        %1459 = vmatprep.subr.mxu0 0.0
        %1460 = vmatpush2.msra.mxu0 0.0
        %1461 = vmatprep.subr.mxu0 0.0
        %1462 = vmatpush2.msra.mxu0 0.0
        %1463 = vmatprep.subr.mxu0 0.0
        %1464 = vmatpush2.msra.mxu0 0.0
        %1465 = vmatprep.subr.mxu0 0.0
        %1466 = vmatpush2.msra.mxu0 0.0
        %1467 = vmatprep.subr.mxu0 0.0
        %1468 = vmatpush2.msra.mxu0 0.0
        %1469 = vmatprep.subr.mxu0 0.0
        %1470 = vmatpush2.msra.mxu0 0.0
        %1471 = vmatprep.subr.mxu0 0.0
        %1472 = vmatpush2.msra.mxu0 0.0
        %1473 = vmatprep.subr.mxu0 0.0
        %1474 = vmatpush2.msra.mxu0 0.0
        %1475 = vmatprep.subr.mxu0 0.0
        %1476 = vmatpush2.msra.mxu0 0.0
        %1477 = vmatprep.subr.mxu0 0.0
        %1478 = vmatpush2.msra.mxu0 0.0
        %1479 = vmatprep.mubr.f32.mxu0 0.0
        %1480 = vmatmul.mubr.f32.gmra.mxu0 %v1376
        %v1481 = vpop.f32.mrf.mxu0
        %v1482 = vadd.f32 %v1413, %v1481
        %v1483 = vpop.f32.mrf.mxu0
        %1484 = vmatprep.mubr.f32.mxu0 0.0
        %1485 = vmatmul.mubr.f32.gmra.mxu0 %v1377
        %v1486 = vpop.f32.mrf.mxu0
        %v1487 = vadd.f32 %v1413, %v1486
        %v1488 = vpop.f32.mrf.mxu0
        %1489 = vmatprep.mubr.f32.mxu0 0.0
        %1490 = vmatmul.mubr.f32.gmra.mxu0 %v1378
        %v1491 = vpop.f32.mrf.mxu0
        %v1492 = vadd.f32 %v1413, %v1491
        %v1493 = vpop.f32.mrf.mxu0
        %1494 = vmatprep.mubr.f32.mxu0 0.0
        %1495 = vmatmul.mubr.f32.gmra.mxu0 %v1379
        %v1496 = vpop.f32.mrf.mxu0
        %v1497 = vadd.f32 %v1413, %v1496
        %v1498 = vpop.f32.mrf.mxu0
        %1499 = vmatprep.mubr.f32.mxu0 0.0
        %1500 = vmatmul.mubr.f32.gmra.mxu0 %v1380
        %v1501 = vpop.f32.mrf.mxu0
        %v1502 = vadd.f32 %v1413, %v1501
        %v1503 = vpop.f32.mrf.mxu0
        %1504 = vmatprep.mubr.f32.mxu0 0.0
        %1505 = vmatmul.mubr.f32.gmra.mxu0 %v1381
        %v1506 = vpop.f32.mrf.mxu0
        %v1507 = vadd.f32 %v1413, %v1506
        %v1508 = vpop.f32.mrf.mxu0
        %1509 = vmatprep.mubr.f32.mxu0 0.0
        %1510 = vmatmul.mubr.f32.gmra.mxu0 %v1382
        %v1511 = vpop.f32.mrf.mxu0
        %v1512 = vadd.f32 %v1413, %v1511
        %v1513 = vpop.f32.mrf.mxu0
        %1514 = vmatprep.mubr.f32.mxu0 0.0
        %1515 = vmatmul.mubr.f32.gmra.mxu0 %v1383
        %v1516 = vpop.f32.mrf.mxu0
        %v1517 = vadd.f32 %v1413, %v1516
        %v1518 = vpop.f32.mrf.mxu0
        %1519 = vmatprep.mubr.f32.mxu0 0.0
        %1520 = vmatmul.mubr.f32.gmra.mxu0 %v1384
        %v1521 = vpop.f32.mrf.mxu0
        %v1522 = vadd.f32 %v1413, %v1521
        %v1523 = vpop.f32.mrf.mxu0
        %1524 = vmatprep.mubr.f32.mxu0 0.0
        %1525 = vmatmul.mubr.f32.gmra.mxu0 %v1385
        %v1526 = vpop.f32.mrf.mxu0
        %v1527 = vadd.f32 %v1413, %v1526
        %v1528 = vpop.f32.mrf.mxu0
        %1529 = vmatprep.mubr.f32.mxu0 0.0
        %1530 = vmatmul.mubr.f32.gmra.mxu0 %v1386
        %v1531 = vpop.f32.mrf.mxu0
        %v1532 = vadd.f32 %v1413, %v1531
        %v1533 = vpop.f32.mrf.mxu0
        %1534 = vmatprep.mubr.f32.mxu0 0.0
        %1535 = vmatmul.mubr.f32.gmra.mxu0 %v1387
        %v1536 = vpop.f32.mrf.mxu0
        %v1537 = vadd.f32 %v1413, %v1536
        %v1538 = vpop.f32.mrf.mxu0
        %1539 = vmatprep.mubr.f32.mxu0 0.0
        %1540 = vmatmul.mubr.f32.gmra.mxu0 %v1388
        %v1541 = vpop.f32.mrf.mxu0
        %v1542 = vadd.f32 %v1413, %v1541
        %v1543 = vpop.f32.mrf.mxu0
        %1544 = vmatprep.mubr.f32.mxu0 0.0
        %1545 = vmatmul.mubr.f32.gmra.mxu0 %v1389
        %v1546 = vpop.f32.mrf.mxu0
        %v1547 = vadd.f32 %v1413, %v1546
        %v1548 = vpop.f32.mrf.mxu0
        %1549 = vmatprep.mubr.f32.mxu0 0.0
        %1550 = vmatmul.mubr.f32.gmra.mxu0 %v1390
        %v1551 = vpop.f32.mrf.mxu0
        %v1552 = vadd.f32 %v1413, %v1551
        %v1553 = vpop.f32.mrf.mxu0
        %1554 = vmatprep.mubr.f32.mxu0 0.0
        %1555 = vmatmul.mubr.f32.gmra.mxu0 %v1391
        %v1556 = vpop.f32.mrf.mxu0
        %v1557 = vadd.f32 %v1413, %v1556
        %v1558 = vpop.f32.mrf.mxu0
        %1559 = vdwg.mxu0
        %1560 = vst [vmem:[%s378] sm:$0xff] %v1482
        %1561 = vst [vmem:[%s378 + $0x8] sm:$0xff] %v1487
        %1562 = vst [vmem:[%s378 + $0x10] sm:$0xff] %v1492
        %1563 = vst [vmem:[%s378 + $0x18] sm:$0xff] %v1497
        %1564 = vst [vmem:[%s378 + $0x20] sm:$0xff] %v1502
        %1565 = vst [vmem:[%s378 + $0x28] sm:$0xff] %v1507
        %1566 = vst [vmem:[%s378 + $0x30] sm:$0xff] %v1512
        %1567 = vst [vmem:[%s378 + $0x38] sm:$0xff] %v1517
        %1568 = vst [vmem:[%s378 + $0x40] sm:$0xff] %v1522
        %1569 = vst [vmem:[%s378 + $0x48] sm:$0xff] %v1527
        %1570 = vst [vmem:[%s378 + $0x50] sm:$0xff] %v1532
        %1571 = vst [vmem:[%s378 + $0x58] sm:$0xff] %v1537
        %1572 = vst [vmem:[%s378 + $0x60] sm:$0xff] %v1542
        %1573 = vst [vmem:[%s378 + $0x68] sm:$0xff] %v1547
        %1574 = vst [vmem:[%s378 + $0x70] sm:$0xff] %v1552
        %1575 = vst [vmem:[%s378 + $0x78] sm:$0xff] %v1557
        %s1576 = sand.u32 %s187, 1
        %s1577 = scalar_lea.sflag [#allocation4], %s1576
        %s1578 = sand.u32 %s187, 1
        %s1579 = smul.addr %s1578, 128
        %s1580 = scalar_lea.vmem [#allocation14], %s1579
        // Predicated region
        $region77: #{tpu_custom_call.1} parent=47 // pred_check
          %p1581 = pneg %p197
        $region78: #{tpu_custom_call.1} parent=47 // pred_check_branch
          %1583 = sbr.rel (%p1581) target = $region80
        $region79: #{tpu_custom_call.1} parent=47 // pred_region
          %s1584 = smul.u32 16, %s27
          %s1586 = ssub.s32 2048, 2048
          %1587 = vsyncadd %s1577, %s1586
          %s1588 = smul.addr %s1584, 128
          %s1589 = scalar_lea.hbm %s7, %s1588
          %s1590 = sshll.u32 %s1580, 4
          %s1591 = int_to_ptr.vmem [resolvable:$true] %s1590
          %1596 = dma.vmem_to_hbm [thread:$0]  %s1591, 2048, %s1589, %s1577, 128, 128, 8
        $region80: #{tpu_custom_call.1} parent=47 // pred_fallthru
          _
      $region48: #{tpu_custom_call.1} parent=5 // pred_fallthru
        _
      %p1597 = scmp.le.s32.totalorder 2, %s22
      // Predicated region
      $region81: #{tpu_custom_call.1} parent=5 // pred_check
        %p1598 = pneg %p1597
      $region82: #{tpu_custom_call.1} parent=5 // pred_check_branch
        %1600 = sbr.rel (%p1598) target = $region84
      $region83: #{tpu_custom_call.1} parent=5 // pred_region
        %s1601 = ssub.s32 %s22, 2
        // Predicated region
        $region85: #{tpu_custom_call.1} parent=83 // pred_check
          %p1602 = pneg %p203
        $region86: #{tpu_custom_call.1} parent=83 // pred_check_branch
          %1604 = sbr.rel (%p1602) target = $region88
        $region87: #{tpu_custom_call.1} parent=83 // pred_region
          %s1605 = sand.u32 %s188, 1
          %s1606 = scalar_lea.sflag [#allocation4], %s1605
          %s1607 = sand.u32 %s188, 1
          %s1608 = smul.addr %s1607, 128
          %s1609 = scalar_lea.vmem [#allocation14], %s1608
          %1610 = dma.done %s1606, 2048
        $region88: #{tpu_custom_call.1} parent=83 // pred_fallthru
          _
      $region84: #{tpu_custom_call.1} parent=5 // pred_fallthru
        _
    $region6: #{tpu_custom_call.1} parent=1 // loop_footer
      %s26 = sadd.s32 1, %s22
    $region7: #{tpu_custom_call.1} parent=1 // loop_footer_branch
      %21 = sbr.rel target = $region3
    $region8: #{tpu_custom_call.1} parent=1 // loop_exit
      _
    %1611 = vsyncpa [#allocation3], 1
    %s1612 = scalar_lea.sflag [#allocation3], 1
    %1613 = vsyncpa %s1612, 1
    %1614 = vsyncpa [#allocation6], 1
    %1615 = vsyncpa [#allocation9], 1
    %1616 = vsyncpa [#allocation12], 1
    %1617 = vsyncpa [#allocation4], 1
    %s1618 = scalar_lea.sflag [#allocation4], 1
    %1619 = vsyncpa %s1618, 1

</llo_original>
